<compile_context>
chip_gen: v5e
topology: v5e:2x2
jax: 0.10.0
libtpu: 0.0.40
codegen_flags: <defaults>
</compile_context>

<pallas_src>
import functools

import jax
import jax.numpy as jnp
from jax.experimental import pallas as pl
from jax.experimental.pallas import tpu as pltpu


def _round_up(x, m):
    return (x + m - 1) // m * m


def _make_kernel(KH, KW, dil, Wp, L, cout_p, activation):
    """One grid step = one batch element: KH*KW static tap slices, per-tap
    transposed MXU dots accumulated in f32, bias + activation, lane-dense
    (Cout, HO1*Wp) store."""

    def kernel(x_ref, w_ref, b_ref, o_ref):
        # x_ref: (cin_p, F)             flat padded image (+ small zero tail)
        # w_ref: (KH*KW*cout_p, cin_p)  BN-folded, per-tap transposed weights
        # b_ref: (cout_p, 1)            BN-folded bias (f32)
        # o_ref: (cout_p, L)            lane-dense transposed output tile
        acc = jnp.zeros((cout_p, L), jnp.float32)
        for kh in range(KH):
            for kw in range(KW):
                t = kh * KW + kw
                off = dil * (kh * Wp + kw)                     # static lane offset
                x_t = x_ref[:, off:off + L]                    # (cin_p, L)
                w_t = w_ref[t * cout_p:(t + 1) * cout_p, :]    # (cout_p, cin_p)
                acc = acc + jnp.dot(w_t, x_t,
                                    preferred_element_type=jnp.float32)
        acc = acc + b_ref[...]
        if activation == "relu":
            acc = jnp.maximum(acc, 0.0)
        elif activation == "elu":
            # TODO(synk): alpha hard-coded to 1.0 (nn.ELU default).
            acc = jnp.where(acc > 0.0, acc, jnp.expm1(acc))
        elif activation is not None:
            raise ValueError(f"unsupported activation: {activation}")
        o_ref[...] = acc.astype(o_ref.dtype)

    return kernel


def resize_conv2d_bn_pallas(x_nchw, conv_w, conv_b,
                            bn_gamma, bn_beta, bn_mean, bn_var,
                            *, stride=1, padding=1, dilation=1,
                            scale_factor=2, eps=1e-5, activation=None,
                            compute_dtype=jnp.bfloat16):
    """Forward of ResizeConv2dBN: upsample -> conv -> BN (eval) -> activation."""
    N, Cin, H, W = x_nchw.shape
    Cout, Cin_w, KH, KW = conv_w.shape
    assert Cin == Cin_w
    assert int(scale_factor) == scale_factor and scale_factor >= 1
    scale_factor = int(scale_factor)
    if compute_dtype is None:
        compute_dtype = x_nchw.dtype
    out_dtype = x_nchw.dtype

    # --- wrapper glue (layout only): nearest upsample + zero pad, NCHW kept ---
    x_up = jnp.repeat(jnp.repeat(x_nchw, scale_factor, axis=2),
                      scale_factor, axis=3)
    Hu, Wu = H * scale_factor, W * scale_factor
    Hp, Wp = Hu + 2 * padding, Wu + 2 * padding
    HO1 = Hp - dilation * (KH - 1)            # stride-1 (dense) output height
    WO1 = Wp - dilation * (KW - 1)            # stride-1 (dense) output width
    assert HO1 > 0 and WO1 > 0

    cin_p = _round_up(Cin, 8)                 # one sublane group for the K dim
    cout_p = _round_up(Cout, 8)               # one sublane group for the M dim
    L = HO1 * Wp                              # dense output lanes per image
    tail = dilation * (KW - 1)                # keeps the last tap slice in bounds
    F = Hp * Wp + tail

    x_pad = jnp.pad(x_up, ((0, 0), (0, 0),
                           (padding, padding), (padding, padding)))
    x_flat = jnp.pad(x_pad.reshape(N, Cin, Hp * Wp),
                     ((0, 0), (0, cin_p - Cin), (0, tail))).astype(compute_dtype)

    # --- fold inference-mode BatchNorm into conv weight & bias ---
    # TODO(synk): training-mode BatchNorm2d (batch statistics + running-stat
    # update) would need an extra reduction pass; only eval-mode BN is fused.
    if conv_b is None:
        conv_b = jnp.zeros((Cout,), conv_w.dtype)
    bn_scale = bn_gamma / jnp.sqrt(bn_var + eps)                       # (Cout,)
    w_t = jnp.transpose(conv_w, (2, 3, 0, 1))                          # (KH,KW,Cout,Cin)
    w_t = w_t * bn_scale[None, None, :, None]
    w_t = jnp.pad(w_t, ((0, 0), (0, 0),
                        (0, cout_p - Cout), (0, cin_p - Cin)))
    w_flat = w_t.reshape(KH * KW * cout_p, cin_p).astype(compute_dtype)
    b_fold = (conv_b - bn_mean) * bn_scale + bn_beta
    b_fold = jnp.pad(b_fold, (0, cout_p - Cout)).reshape(cout_p, 1).astype(
        jnp.float32)

    kernel = _make_kernel(KH, KW, dilation, Wp, L, cout_p, activation)

    out_flat = pl.pallas_call(
        kernel,
        out_shape=jax.ShapeDtypeStruct((N, cout_p, L), out_dtype),
        grid=(N,),                        # one step per image; even (=2) for v7x megacore
        in_specs=[
            pl.BlockSpec((None, cin_p, F), lambda n: (n, 0, 0)),
            pl.BlockSpec((KH * KW * cout_p, cin_p), lambda n: (0, 0)),
            pl.BlockSpec((cout_p, 1), lambda n: (0, 0)),
        ],
        out_specs=pl.BlockSpec((None, cout_p, L), lambda n: (n, 0, 0)),
        compiler_params=pltpu.CompilerParams(
            dimension_semantics=("parallel",),      # megacore split on v7x
            vmem_limit_bytes=32 * 1024 * 1024,      # footprint is <1 MiB; safe on v5e/v6e/v7x
        ),
    )(x_flat, w_flat, b_fold)

    # --- wrapper glue: drop padded channels / garbage lanes, apply stride ---
    # TODO(synk): stride > 1 is computed densely and subsampled here (compute
    # waste ~stride^2); fine for this decoder-style module where stride == 1.
    out = out_flat[:, :Cout, :].reshape(N, Cout, HO1, Wp)[:, :, :, :WO1]
    out = out[:, :, ::stride, ::stride]
    return out


def init_params(key, in_ch, out_ch, ksize, bias=True):
    """Deterministic init mirroring nn.Conv2d / nn.BatchNorm2d defaults
    (BN stats perturbed so the fusion is actually exercised)."""
    kw, kb, kg, kbe, km, kv = jax.random.split(key, 6)
    fan_in = in_ch * ksize * ksize
    bound = 1.0 / (fan_in ** 0.5)
    weight = jax.random.uniform(kw, (out_ch, in_ch, ksize, ksize),
                                jnp.float32, -bound, bound)
    b = (jax.random.uniform(kb, (out_ch,), jnp.float32, -bound, bound)
         if bias else None)
    gamma = jax.random.uniform(kg, (out_ch,), jnp.float32, 0.5, 1.5)
    beta = 0.1 * jax.random.normal(kbe, (out_ch,), jnp.float32)
    running_mean = 0.1 * jax.random.normal(km, (out_ch,), jnp.float32)
    running_var = jax.random.uniform(kv, (out_ch,), jnp.float32, 0.5, 1.5)
    return weight, b, gamma, beta, running_mean, running_var


if __name__ == "__main__":
    # Module config: ResizeConv2dBN(4, 8, kernel_size=3, stride=1, padding=1,
    #                               dilation=1, scale_factor=2, activation=relu)
    N, Cin, H, W = 2, 4, 16, 16
    Cout, Ksz, S, P, D, SCALE = 8, 3, 1, 1, 1, 2
    EPS = 1e-5

    key = jax.random.PRNGKey(0)
    kx, kparam = jax.random.split(key)
    x = jax.random.normal(kx, (N, Cin, H, W), jnp.float32)
    (weight, bias, gamma, beta,
     running_mean, running_var) = init_params(kparam, Cin, Cout, Ksz, bias=True)

    run = functools.partial(
        resize_conv2d_bn_pallas, x, weight, bias, gamma, beta,
        running_mean, running_var, stride=S, padding=P, dilation=D,
        scale_factor=SCALE, eps=EPS, activation="relu")

    out_f32 = jax.block_until_ready(run(compute_dtype=jnp.float32))
    out_bf16 = jax.block_until_ready(run())          # default: bf16 operands

    # Pure-JAX f32 reference: upsample -> conv -> BN(eval) -> relu.
    x_up = jnp.repeat(jnp.repeat(x, SCALE, axis=2), SCALE, axis=3)
    ref = jax.lax.conv_general_dilated(
        x_up, weight, window_strides=(S, S), padding=((P, P), (P, P)),
        rhs_dilation=(D, D), dimension_numbers=("NCHW", "OIHW", "NCHW"))
    ref = ref + bias.reshape(1, Cout, 1, 1)
    ref = ((ref - running_mean.reshape(1, Cout, 1, 1))
           / jnp.sqrt(running_var.reshape(1, Cout, 1, 1) + EPS)
           * gamma.reshape(1, Cout, 1, 1)
           + beta.reshape(1, Cout, 1, 1))
    ref = jnp.maximum(ref, 0.0)

    HO = (H * SCALE + 2 * P - D * (Ksz - 1) - 1) // S + 1
    assert out_f32.shape == (N, Cout, HO, HO), out_f32.shape
    assert out_bf16.shape == (N, Cout, HO, HO), out_bf16.shape

    err32 = float(jnp.max(jnp.abs(out_f32 - ref)))
    assert jnp.allclose(out_f32, ref, atol=1e-4, rtol=1e-4), err32
    # bf16-operand path: loose tolerance (bf16 rounding of x and folded W);
    # algorithmic correctness is established by the tight f32 check above.
    err16 = float(jnp.max(jnp.abs(out_bf16 - ref)))
    assert jnp.allclose(out_bf16, ref, atol=2e-1, rtol=1e-1), err16
    print("KERNEL_OK")
</pallas_src>

<mosaic_0001>
module attributes {stable_mosaic.version = 11 : i64} {
  func.func @kernel(%arg0: i32, %arg1: memref<1x8x1158xf32, #tpu.memory_space<vmem>>, %arg2: memref<72x8xf32, #tpu.memory_space<vmem>>, %arg3: memref<8x1xf32, #tpu.memory_space<vmem>>, %arg4: memref<1x8x1088xf32, #tpu.memory_space<vmem>>) attributes {dimension_semantics = [#tpu.dimension_semantics<parallel>], iteration_bounds = array<i64: 2>, scalar_prefetch = 0 : i64, scratch_operands = 0 : i64, tpu.core_type = #tpu.core_type<tc>, window_params = [{transform_indices = @transform_0, window_bounds = array<i64: 1, 8, 1158>}, {pipeline_mode = #tpu.pipeline_mode<synchronous>, transform_indices = @transform_1, window_bounds = array<i64: 72, 8>}, {pipeline_mode = #tpu.pipeline_mode<synchronous>, transform_indices = @transform_2, window_bounds = array<i64: 8, 1>}, {transform_indices = @transform_3, window_bounds = array<i64: 1, 8, 1088>}]} {
    %cst = arith.constant 0.000000e+00 : f32
    %0 = vector.broadcast %cst : f32 to vector<8x1088xf32>
    %c0 = arith.constant 0 : index
    %c0_0 = arith.constant 0 : index
    %c0_1 = arith.constant 0 : index
    %1 = vector.load %arg1[%c0, %c0_0, %c0_1] : memref<1x8x1158xf32, #tpu.memory_space<vmem>>, vector<1x8x1088xf32>
    %2 = vector.shape_cast %1 : vector<1x8x1088xf32> to vector<8x1088xf32>
    %c0_2 = arith.constant 0 : index
    %c0_3 = arith.constant 0 : index
    %3 = vector.load %arg2[%c0_2, %c0_3] : memref<72x8xf32, #tpu.memory_space<vmem>>, vector<8x8xf32>
    %cst_4 = arith.constant dense<0.000000e+00> : vector<8x1088xf32>
    %4 = tpu.matmul %3, %2, %cst_4 {dimension_numbers = #tpu.dot_dimension_numbers<[1], [0], [0], [1], [0, 0, 1, 1], [], []>} : vector<8x8xf32>, vector<8x1088xf32>, vector<8x1088xf32> -> vector<8x1088xf32>
    %5 = arith.addf %0, %4 : vector<8x1088xf32>
    %c0_5 = arith.constant 0 : index
    %c0_6 = arith.constant 0 : index
    %c1 = arith.constant 1 : index
    %6 = vector.load %arg1[%c0_5, %c0_6, %c1] : memref<1x8x1158xf32, #tpu.memory_space<vmem>>, vector<1x8x1088xf32>
    %7 = vector.shape_cast %6 : vector<1x8x1088xf32> to vector<8x1088xf32>
    %c8 = arith.constant 8 : index
    %c0_7 = arith.constant 0 : index
    %8 = vector.load %arg2[%c8, %c0_7] : memref<72x8xf32, #tpu.memory_space<vmem>>, vector<8x8xf32>
    %cst_8 = arith.constant dense<0.000000e+00> : vector<8x1088xf32>
    %9 = tpu.matmul %8, %7, %cst_8 {dimension_numbers = #tpu.dot_dimension_numbers<[1], [0], [0], [1], [0, 0, 1, 1], [], []>} : vector<8x8xf32>, vector<8x1088xf32>, vector<8x1088xf32> -> vector<8x1088xf32>
    %10 = arith.addf %5, %9 : vector<8x1088xf32>
    %c0_9 = arith.constant 0 : index
    %c0_10 = arith.constant 0 : index
    %c2 = arith.constant 2 : index
    %11 = vector.load %arg1[%c0_9, %c0_10, %c2] : memref<1x8x1158xf32, #tpu.memory_space<vmem>>, vector<1x8x1088xf32>
    %12 = vector.shape_cast %11 : vector<1x8x1088xf32> to vector<8x1088xf32>
    %c16 = arith.constant 16 : index
    %c0_11 = arith.constant 0 : index
    %13 = vector.load %arg2[%c16, %c0_11] : memref<72x8xf32, #tpu.memory_space<vmem>>, vector<8x8xf32>
    %cst_12 = arith.constant dense<0.000000e+00> : vector<8x1088xf32>
    %14 = tpu.matmul %13, %12, %cst_12 {dimension_numbers = #tpu.dot_dimension_numbers<[1], [0], [0], [1], [0, 0, 1, 1], [], []>} : vector<8x8xf32>, vector<8x1088xf32>, vector<8x1088xf32> -> vector<8x1088xf32>
    %15 = arith.addf %10, %14 : vector<8x1088xf32>
    %c0_13 = arith.constant 0 : index
    %c0_14 = arith.constant 0 : index
    %c34 = arith.constant 34 : index
    %16 = vector.load %arg1[%c0_13, %c0_14, %c34] : memref<1x8x1158xf32, #tpu.memory_space<vmem>>, vector<1x8x1088xf32>
    %17 = vector.shape_cast %16 : vector<1x8x1088xf32> to vector<8x1088xf32>
    %c24 = arith.constant 24 : index
    %c0_15 = arith.constant 0 : index
    %18 = vector.load %arg2[%c24, %c0_15] : memref<72x8xf32, #tpu.memory_space<vmem>>, vector<8x8xf32>
    %cst_16 = arith.constant dense<0.000000e+00> : vector<8x1088xf32>
    %19 = tpu.matmul %18, %17, %cst_16 {dimension_numbers = #tpu.dot_dimension_numbers<[1], [0], [0], [1], [0, 0, 1, 1], [], []>} : vector<8x8xf32>, vector<8x1088xf32>, vector<8x1088xf32> -> vector<8x1088xf32>
    %20 = arith.addf %15, %19 : vector<8x1088xf32>
    %c0_17 = arith.constant 0 : index
    %c0_18 = arith.constant 0 : index
    %c35 = arith.constant 35 : index
    %21 = vector.load %arg1[%c0_17, %c0_18, %c35] : memref<1x8x1158xf32, #tpu.memory_space<vmem>>, vector<1x8x1088xf32>
    %22 = vector.shape_cast %21 : vector<1x8x1088xf32> to vector<8x1088xf32>
    %c32 = arith.constant 32 : index
    %c0_19 = arith.constant 0 : index
    %23 = vector.load %arg2[%c32, %c0_19] : memref<72x8xf32, #tpu.memory_space<vmem>>, vector<8x8xf32>
    %cst_20 = arith.constant dense<0.000000e+00> : vector<8x1088xf32>
    %24 = tpu.matmul %23, %22, %cst_20 {dimension_numbers = #tpu.dot_dimension_numbers<[1], [0], [0], [1], [0, 0, 1, 1], [], []>} : vector<8x8xf32>, vector<8x1088xf32>, vector<8x1088xf32> -> vector<8x1088xf32>
    %25 = arith.addf %20, %24 : vector<8x1088xf32>
    %c0_21 = arith.constant 0 : index
    %c0_22 = arith.constant 0 : index
    %c36 = arith.constant 36 : index
    %26 = vector.load %arg1[%c0_21, %c0_22, %c36] : memref<1x8x1158xf32, #tpu.memory_space<vmem>>, vector<1x8x1088xf32>
    %27 = vector.shape_cast %26 : vector<1x8x1088xf32> to vector<8x1088xf32>
    %c40 = arith.constant 40 : index
    %c0_23 = arith.constant 0 : index
    %28 = vector.load %arg2[%c40, %c0_23] : memref<72x8xf32, #tpu.memory_space<vmem>>, vector<8x8xf32>
    %cst_24 = arith.constant dense<0.000000e+00> : vector<8x1088xf32>
    %29 = tpu.matmul %28, %27, %cst_24 {dimension_numbers = #tpu.dot_dimension_numbers<[1], [0], [0], [1], [0, 0, 1, 1], [], []>} : vector<8x8xf32>, vector<8x1088xf32>, vector<8x1088xf32> -> vector<8x1088xf32>
    %30 = arith.addf %25, %29 : vector<8x1088xf32>
    %c0_25 = arith.constant 0 : index
    %c0_26 = arith.constant 0 : index
    %c68 = arith.constant 68 : index
    %31 = vector.load %arg1[%c0_25, %c0_26, %c68] : memref<1x8x1158xf32, #tpu.memory_space<vmem>>, vector<1x8x1088xf32>
    %32 = vector.shape_cast %31 : vector<1x8x1088xf32> to vector<8x1088xf32>
    %c48 = arith.constant 48 : index
    %c0_27 = arith.constant 0 : index
    %33 = vector.load %arg2[%c48, %c0_27] : memref<72x8xf32, #tpu.memory_space<vmem>>, vector<8x8xf32>
    %cst_28 = arith.constant dense<0.000000e+00> : vector<8x1088xf32>
    %34 = tpu.matmul %33, %32, %cst_28 {dimension_numbers = #tpu.dot_dimension_numbers<[1], [0], [0], [1], [0, 0, 1, 1], [], []>} : vector<8x8xf32>, vector<8x1088xf32>, vector<8x1088xf32> -> vector<8x1088xf32>
    %35 = arith.addf %30, %34 : vector<8x1088xf32>
    %c0_29 = arith.constant 0 : index
    %c0_30 = arith.constant 0 : index
    %c69 = arith.constant 69 : index
    %36 = vector.load %arg1[%c0_29, %c0_30, %c69] : memref<1x8x1158xf32, #tpu.memory_space<vmem>>, vector<1x8x1088xf32>
    %37 = vector.shape_cast %36 : vector<1x8x1088xf32> to vector<8x1088xf32>
    %c56 = arith.constant 56 : index
    %c0_31 = arith.constant 0 : index
    %38 = vector.load %arg2[%c56, %c0_31] : memref<72x8xf32, #tpu.memory_space<vmem>>, vector<8x8xf32>
    %cst_32 = arith.constant dense<0.000000e+00> : vector<8x1088xf32>
    %39 = tpu.matmul %38, %37, %cst_32 {dimension_numbers = #tpu.dot_dimension_numbers<[1], [0], [0], [1], [0, 0, 1, 1], [], []>} : vector<8x8xf32>, vector<8x1088xf32>, vector<8x1088xf32> -> vector<8x1088xf32>
    %40 = arith.addf %35, %39 : vector<8x1088xf32>
    %c0_33 = arith.constant 0 : index
    %c0_34 = arith.constant 0 : index
    %c70 = arith.constant 70 : index
    %41 = vector.load %arg1[%c0_33, %c0_34, %c70] : memref<1x8x1158xf32, #tpu.memory_space<vmem>>, vector<1x8x1088xf32>
    %42 = vector.shape_cast %41 : vector<1x8x1088xf32> to vector<8x1088xf32>
    %c64 = arith.constant 64 : index
    %c0_35 = arith.constant 0 : index
    %43 = vector.load %arg2[%c64, %c0_35] : memref<72x8xf32, #tpu.memory_space<vmem>>, vector<8x8xf32>
    %cst_36 = arith.constant dense<0.000000e+00> : vector<8x1088xf32>
    %44 = tpu.matmul %43, %42, %cst_36 {dimension_numbers = #tpu.dot_dimension_numbers<[1], [0], [0], [1], [0, 0, 1, 1], [], []>} : vector<8x8xf32>, vector<8x1088xf32>, vector<8x1088xf32> -> vector<8x1088xf32>
    %45 = arith.addf %40, %44 : vector<8x1088xf32>
    %c0_37 = arith.constant 0 : index
    %c0_38 = arith.constant 0 : index
    %46 = vector.load %arg3[%c0_37, %c0_38] : memref<8x1xf32, #tpu.memory_space<vmem>>, vector<8x1xf32>
    %47 = vector.broadcast %46 : vector<8x1xf32> to vector<8x1088xf32>
    %48 = arith.addf %45, %47 : vector<8x1088xf32>
    %cst_39 = arith.constant 0.000000e+00 : f32
    %49 = vector.broadcast %cst_39 : f32 to vector<8x1088xf32>
    %50 = arith.maximumf %48, %49 : vector<8x1088xf32>
    %c0_40 = arith.constant 0 : index
    %c0_41 = arith.constant 0 : index
    %c0_42 = arith.constant 0 : index
    %51 = vector.load %arg4[%c0_40, %c0_41, %c0_42] : memref<1x8x1088xf32, #tpu.memory_space<vmem>>, vector<1x8x1088xf32>
    %52 = vector.shape_cast %51 : vector<1x8x1088xf32> to vector<8x1088xf32>
    %53 = vector.shape_cast %50 : vector<8x1088xf32> to vector<1x8x1088xf32>
    tpu.vector_store %arg4[%c0_40, %c0_41, %c0_42], %53 {strides = array<i32>} : memref<1x8x1088xf32, #tpu.memory_space<vmem>>, vector<1x8x1088xf32>,
    return
  }
  func.func @transform_0(%arg0: i32) -> (i32, i32, i32) {
    %c0_i32 = arith.constant 0 : i32
    %c0_i32_0 = arith.constant 0 : i32
    %c0_i32_1 = arith.constant 0 : i32
    return %arg0, %c0_i32, %c0_i32_0 : i32, i32, i32
  }
  func.func @transform_1(%arg0: i32) -> (i32, i32) {
    %c0_i32 = arith.constant 0 : i32
    %c0_i32_0 = arith.constant 0 : i32
    %c0_i32_1 = arith.constant 0 : i32
    return %c0_i32, %c0_i32_0 : i32, i32
  }
  func.func @transform_2(%arg0: i32) -> (i32, i32) {
    %c0_i32 = arith.constant 0 : i32
    %c0_i32_0 = arith.constant 0 : i32
    %c0_i32_1 = arith.constant 0 : i32
    return %c0_i32, %c0_i32_0 : i32, i32
  }
  func.func @transform_3(%arg0: i32) -> (i32, i32, i32) {
    %c0_i32 = arith.constant 0 : i32
    %c0_i32_0 = arith.constant 0 : i32
    %c0_i32_1 = arith.constant 0 : i32
    return %arg0, %c0_i32, %c0_i32_0 : i32, i32, i32
  }
}

</mosaic_0001>

<llo_original>
// kernel: tpu_custom_call.1
$region0: #{tpu_custom_call.1}
  #allocation0 [shape = 'u32[]', space=smem, size = 0x4, offset = 0x4, fixed_abs, tag = 'smem constant byte address 0x4 - core index']
  #allocation1 [shape = 'u32[72,128]{1,0:T(1,128)}', space=vmem, size = 0x9000, scoped, tag = 'internal scratch']
  %s0 = inlined_call_operand.hbm [shape: f32[2,8,1158], index: 0, kind: input, shape index: {}]
  %s1 = inlined_call_operand.vmem [shape: f32[72,8], index: 1, kind: input, shape index: {}]
  %s2 = inlined_call_operand.vmem [shape: f32[8,1], index: 2, kind: input, shape index: {}]
  %s3 = inlined_call_operand.hbm [shape: f32[2,8,1088], index: 3, kind: output, shape index: {}]
  %s4 = sld [smem:[#allocation0]]
  $region49: #{tpu_custom_call.1} parent=0
    _
  %s6 = ssub.s32 1, %s4
  %s7 = scalar_select 0, %s6, %s4
  $region1: #{tpu_custom_call.1} parent=0
    #allocation2 [shape = 'u8[81920]{0}', space=vmem, size = 0x14000, scoped, tag = 'input window, operand 0']
    #allocation3 [shape = 's32[2]{0}', space=sflag, size = 0x8, scoped, tag = 'scoped memory for tpu_custom_call.1']
    #allocation4 [shape = 's32[2]{0}', space=sflag, size = 0x8, scoped, tag = 'scoped memory for tpu_custom_call.1']
    #allocation5 [shape = 'u8[73728]{0}', space=vmem, size = 0x12000, scoped, tag = 'output window, operand 0']
    %8 = vsyncpa [#allocation3], 0
    %s9 = scalar_lea.sflag [#allocation3], 1
    %10 = vsyncpa %s9, 0
    %11 = vsyncpa [#allocation4], 0
    %s12 = scalar_lea.sflag [#allocation4], 1
    %13 = vsyncpa %s12, 0
    loop: start=0, step=1, limit=4
    $region2: #{tpu_custom_call.1} parent=1 // loop_pre_header
      _
    $region3: #{tpu_custom_call.1} parent=1 // loop_header
      %s15 = sphi 0, %s19
      %p16 = scmp.ge.s32.totalorder %s15, 4
      %s25 = sphi 0, %s27
      %s28 = sphi 0, %s25
      %s29 = sphi 0, %s28
      %s45 = sphi 0, %s29
      %s49 = sphi 0, %s49
      %s51 = sphi 0, %s49
      %s52 = sphi 0, %s51
      %s66 = sphi 0, %s52
      %s70 = sphi 0, %s70
      %s72 = sphi 0, %s70
      %s73 = sphi 0, %s72
      %s87 = sphi 0, %s73
      %s93 = sphi 0, %s95
      %s96 = sphi 0, %s93
      %s97 = sphi 0, %s96
      %s113 = sphi 0, %s97
    $region4: #{tpu_custom_call.1} parent=1 // loop_header_branch
      %18 = sbr.rel (%p16) target = $region8
    $region5: #{tpu_custom_call.1} parent=1 // loop_body
      %s20 = ssub.s32 %s15, 1
      %s21 = ssub.s32 %s15, 2
      %s22 = sadd.s32 %s15, 1
      %s23 = ssub.s32 %s15, %s22
      %p24 = scmp.eq.s32.totalorder %s23, 0
      %s26 = sadd.s32 %s25, 1
      %s27 = scalar_select %p24, %s25, %s26
      %p30 = pneg %p24
      %p31 = scmp.eq.s32.totalorder %s15, 1
      %p32 = por %p30, %p31
      %p33 = scmp.ne.s32.totalorder %s25, %s28
      %p34 = scmp.eq.s32.totalorder %s15, 0
      %p35 = por %p33, %p34
      %p36 = scmp.ne.s32.totalorder %s25, %s28
      %p37 = scmp.eq.s32.totalorder %s20, 1
      %p38 = por %p36, %p37
      %p39 = scmp.ne.s32.totalorder %s28, %s29
      %p40 = scmp.eq.s32.totalorder %s20, 0
      %p41 = por %p39, %p40
      %p42 = scmp.ne.s32.totalorder %s28, %s29
      %p43 = scmp.eq.s32.totalorder %s21, 1
      %p44 = por %p42, %p43
      %p46 = scmp.ne.s32.totalorder %s29, %s45
      %p47 = scmp.eq.s32.totalorder %s21, 0
      %p48 = por %p46, %p47
      %s50 = sadd.s32 %s49, 1
      %p53 = scmp.eq.s32.totalorder %s15, 1
      %p54 = scmp.ne.s32.totalorder %s49, %s51
      %p55 = scmp.eq.s32.totalorder %s15, 0
      %p56 = por %p54, %p55
      %p57 = scmp.ne.s32.totalorder %s49, %s51
      %p58 = scmp.eq.s32.totalorder %s20, 1
      %p59 = por %p57, %p58
      %p60 = scmp.ne.s32.totalorder %s51, %s52
      %p61 = scmp.eq.s32.totalorder %s20, 0
      %p62 = por %p60, %p61
      %p63 = scmp.ne.s32.totalorder %s51, %s52
      %p64 = scmp.eq.s32.totalorder %s21, 1
      %p65 = por %p63, %p64
      %p67 = scmp.ne.s32.totalorder %s52, %s66
      %p68 = scmp.eq.s32.totalorder %s21, 0
      %p69 = por %p67, %p68
      %s71 = sadd.s32 %s70, 1
      %p74 = scmp.eq.s32.totalorder %s15, 1
      %p75 = scmp.ne.s32.totalorder %s70, %s72
      %p76 = scmp.eq.s32.totalorder %s15, 0
      %p77 = por %p75, %p76
      %p78 = scmp.ne.s32.totalorder %s70, %s72
      %p79 = scmp.eq.s32.totalorder %s20, 1
      %p80 = por %p78, %p79
      %p81 = scmp.ne.s32.totalorder %s72, %s73
      %p82 = scmp.eq.s32.totalorder %s20, 0
      %p83 = por %p81, %p82
      %p84 = scmp.ne.s32.totalorder %s72, %s73
      %p85 = scmp.eq.s32.totalorder %s21, 1
      %p86 = por %p84, %p85
      %p88 = scmp.ne.s32.totalorder %s73, %s87
      %p89 = scmp.eq.s32.totalorder %s21, 0
      %p90 = por %p88, %p89
      %s91 = ssub.s32 %s15, %s22
      %p92 = scmp.eq.s32.totalorder %s91, 0
      %s94 = sadd.s32 %s93, 1
      %s95 = scalar_select %p92, %s93, %s94
      %p98 = pneg %p92
      %p99 = scmp.eq.s32.totalorder %s15, 1
      %p100 = por %p98, %p99
      %p101 = scmp.ne.s32.totalorder %s93, %s96
      %p102 = scmp.eq.s32.totalorder %s15, 0
      %p103 = por %p101, %p102
      %p104 = scmp.ne.s32.totalorder %s93, %s96
      %p105 = scmp.eq.s32.totalorder %s20, 1
      %p106 = por %p104, %p105
      %p107 = scmp.ne.s32.totalorder %s96, %s97
      %p108 = scmp.eq.s32.totalorder %s20, 0
      %p109 = por %p107, %p108
      %p110 = scmp.ne.s32.totalorder %s96, %s97
      %p111 = scmp.eq.s32.totalorder %s21, 1
      %p112 = por %p110, %p111
      %p114 = scmp.ne.s32.totalorder %s97, %s113
      %p115 = scmp.eq.s32.totalorder %s21, 0
      %p116 = por %p114, %p115
      %p117 = scmp.le.s32.totalorder 1, %s15
      %p118 = scmp.lt.s32.totalorder %s15, 3
      %p119 = pnand %p117, %p118
      %p120 = pneg %p119
      // Predicated region
      $region9: #{tpu_custom_call.1} parent=5 // pred_check
        _
      $region10: #{tpu_custom_call.1} parent=5 // pred_check_branch
        %122 = sbr.rel (%p119) target = $region12
      $region11: #{tpu_custom_call.1} parent=5 // pred_region
        %s123 = ssub.s32 %s15, 1
        // Predicated region
        $region13: #{tpu_custom_call.1} parent=11 // pred_check
          %p124 = pneg %p62
        $region14: #{tpu_custom_call.1} parent=11 // pred_check_branch
          %126 = sbr.rel (%p124) target = $region16
        $region15: #{tpu_custom_call.1} parent=11 // pred_region
          _
        $region16: #{tpu_custom_call.1} parent=11 // pred_fallthru
          _
        // Predicated region
        $region17: #{tpu_custom_call.1} parent=11 // pred_check
          %p127 = pneg %p83
        $region18: #{tpu_custom_call.1} parent=11 // pred_check_branch
          %129 = sbr.rel (%p127) target = $region20
        $region19: #{tpu_custom_call.1} parent=11 // pred_region
          _
        $region20: #{tpu_custom_call.1} parent=11 // pred_fallthru
          _
      $region12: #{tpu_custom_call.1} parent=5 // pred_fallthru
        _
      %p130 = scmp.lt.s32.totalorder %s15, 2
      // Predicated region
      $region21: #{tpu_custom_call.1} parent=5 // pred_check
        %p131 = pneg %p130
      $region22: #{tpu_custom_call.1} parent=5 // pred_check_branch
        %133 = sbr.rel (%p131) target = $region24
      $region23: #{tpu_custom_call.1} parent=5 // pred_region
        // Predicated region
        $region25: #{tpu_custom_call.1} parent=23 // pred_check
          %p134 = pneg %p35
        $region26: #{tpu_custom_call.1} parent=23 // pred_check_branch
          %136 = sbr.rel (%p134) target = $region28
        $region27: #{tpu_custom_call.1} parent=23 // pred_region
          %s137 = sand.u32 %s25, 1
          %s138 = scalar_lea.sflag [#allocation3], %s137
          %s139 = sand.u32 %s25, 1
          %s140 = smul.addr %s139, 80
          %s141 = scalar_lea.vmem [#allocation2], %s140
          %143 = vsyncadd %s138, 0
          %s144 = smul.addr %s15, 10
          %s145 = smul.addr %s144, 8
          %s146 = scalar_lea.hbm %s0, %s145
          %s148 = sshll.u32 %s146, 4
          %s149 = int_to_ptr.hbm [resolvable:$true] %s148
          %s150 = sshll.u32 %s141, 4
          %s151 = int_to_ptr.vmem [resolvable:$true] %s150
          %153 = dma.hbm_to_vmem [thread:$0]  %s149, 1280, %s151, %s138
        $region28: #{tpu_custom_call.1} parent=23 // pred_fallthru
          _
      $region24: #{tpu_custom_call.1} parent=5 // pred_fallthru
        _
      %p154 = scmp.le.s32.totalorder 1, %s15
      %p155 = scmp.lt.s32.totalorder %s15, 3
      %p156 = pnand %p154, %p155
      %p157 = pneg %p156
      // Predicated region
      $region29: #{tpu_custom_call.1} parent=5 // pred_check
        _
      $region30: #{tpu_custom_call.1} parent=5 // pred_check_branch
        %159 = sbr.rel (%p156) target = $region32
      $region31: #{tpu_custom_call.1} parent=5 // pred_region
        %s160 = ssub.s32 %s15, 1
        %s161 = sand.u32 %s28, 1
        %s162 = scalar_lea.sflag [#allocation3], %s161
        %s163 = sand.u32 %s28, 1
        %s164 = smul.addr %s163, 80
        %s165 = scalar_lea.vmem [#allocation2], %s164
        // Predicated region
        $region33: #{tpu_custom_call.1} parent=31 // pred_check
          %p166 = pneg %p41
        $region34: #{tpu_custom_call.1} parent=31 // pred_check_branch
          %168 = sbr.rel (%p166) target = $region36
        $region35: #{tpu_custom_call.1} parent=31 // pred_region
          %170 = dma.done %s162, 1280
        $region36: #{tpu_custom_call.1} parent=31 // pred_fallthru
          _
        %s171 = sand.u32 %s28, 1
        %s172 = scalar_lea.sflag [#allocation3], %s171
        %s173 = sand.u32 %s28, 1
        %s174 = smul.addr %s173, 80
        %s175 = scalar_lea.vmem [#allocation2], %s174
        %p176 = pneg %p41
        %p177 = pneg %p38
        %p178 = pneg %p62
        %p179 = pneg %p59
        %p180 = pneg %p83
        %p181 = pneg %p80
        %p182 = pneg %p109
        %p183 = pneg %p106
        %s184 = sand.u32 %s96, 1
        %s185 = scalar_lea.sflag [#allocation4], %s184
        %s186 = sand.u32 %s96, 1
        %s187 = smul.addr %s186, 72
        %s188 = scalar_lea.vmem [#allocation5], %s187
        %v189 = vld [vmem:[%s165] sm:$0xff]
        %v190 = vld [vmem:[%s165 + $0x8] sm:$0xff]
        %v191 = vld [vmem:[%s165 + $0x10] sm:$0xff]
        %v192 = vld [vmem:[%s165 + $0x18] sm:$0xff]
        %v193 = vld [vmem:[%s165 + $0x20] sm:$0xff]
        %v194 = vld [vmem:[%s165 + $0x28] sm:$0xff]
        %v195 = vld [vmem:[%s165 + $0x30] sm:$0xff]
        %v196 = vld [vmem:[%s165 + $0x38] sm:$0xff]
        %v197 = vld [vmem:[%s165 + $0x40] sm:$0xff]
        %v198 = vld [vmem:[%s1] sm:$0xff]
        %v199 = vld [vmem:[%s1 + $0x8] sm:$0xff]
        %209 = vrot.lane.b32.xlu0 %v189, 127
        %v210 = vpop.permute.xlu0 %209
        %211 = vrot.lane.b32.xlu0 %v190, 127
        %v212 = vpop.permute.xlu0 %211
        %213 = vrot.lane.b32.xlu0 %v191, 127
        %v214 = vpop.permute.xlu0 %213
        %215 = vrot.lane.b32.xlu0 %v192, 127
        %v216 = vpop.permute.xlu0 %215
        %217 = vrot.lane.b32.xlu0 %v193, 127
        %v218 = vpop.permute.xlu0 %217
        %219 = vrot.lane.b32.xlu0 %v194, 127
        %v220 = vpop.permute.xlu0 %219
        %221 = vrot.lane.b32.xlu0 %v195, 127
        %v222 = vpop.permute.xlu0 %221
        %223 = vrot.lane.b32.xlu0 %v196, 127
        %v224 = vpop.permute.xlu0 %223
        %225 = vrot.lane.b32.xlu0 %v197, 127
        %v226 = vpop.permute.xlu0 %225
        %vm227 = vcmask 1039360
        %v228 = vsel %vm227, %v210, %v212
        %v229 = vsel %vm227, %v212, %v214
        %v230 = vsel %vm227, %v214, %v216
        %v231 = vsel %vm227, %v216, %v218
        %v232 = vsel %vm227, %v218, %v220
        %v233 = vsel %vm227, %v220, %v222
        %v234 = vsel %vm227, %v222, %v224
        %v235 = vsel %vm227, %v224, %v226
        %vm245 = vcmask 64512
        %v247 = vsel %vm245, %v199, 0
        %249 = vmatpush.msra.mxu0 0.0
        %250 = vmatpush.msra.mxu0 0.0
        %251 = vmatpush.msra.mxu0 0.0
        %252 = vmatpush.msra.mxu0 0.0
        %253 = vmatpush.msra.mxu0 0.0
        %254 = vmatpush.msra.mxu0 0.0
        %255 = vmatpush.msra.mxu0 0.0
        %256 = vmatpush.msra.mxu0 0.0
        %257 = vmatpush.msra.mxu0 0.0
        %258 = vmatpush.msra.mxu0 0.0
        %259 = vmatpush.msra.mxu0 0.0
        %260 = vmatpush.msra.mxu0 0.0
        %261 = vmatpush.msra.mxu0 0.0
        %262 = vmatpush.msra.mxu0 0.0
        %263 = vmatpush.msra.mxu0 0.0
        %264 = vmatpush.msra.mxu0 %v228
        %265 = vmatmul.f32.gmra.mxu0 %v247
        %v266 = vpop.f32.mrf.mxu0
        %v267 = vadd.f32 0.0, %v266
        %268 = vdwg.mxu0
        %269 = vmatpush.msra.mxu0 0.0
        %270 = vmatpush.msra.mxu0 0.0
        %271 = vmatpush.msra.mxu0 0.0
        %272 = vmatpush.msra.mxu0 0.0
        %273 = vmatpush.msra.mxu0 0.0
        %274 = vmatpush.msra.mxu0 0.0
        %275 = vmatpush.msra.mxu0 0.0
        %276 = vmatpush.msra.mxu0 0.0
        %277 = vmatpush.msra.mxu0 0.0
        %278 = vmatpush.msra.mxu0 0.0
        %279 = vmatpush.msra.mxu0 0.0
        %280 = vmatpush.msra.mxu0 0.0
        %281 = vmatpush.msra.mxu0 0.0
        %282 = vmatpush.msra.mxu0 0.0
        %283 = vmatpush.msra.mxu0 0.0
        %284 = vmatpush.msra.mxu0 %v229
        %285 = vmatmul.f32.gmra.mxu0 %v247
        %v286 = vpop.f32.mrf.mxu0
        %v287 = vadd.f32 0.0, %v286
        %288 = vdwg.mxu0
        %289 = vmatpush.msra.mxu0 0.0
        %290 = vmatpush.msra.mxu0 0.0
        %291 = vmatpush.msra.mxu0 0.0
        %292 = vmatpush.msra.mxu0 0.0
        %293 = vmatpush.msra.mxu0 0.0
        %294 = vmatpush.msra.mxu0 0.0
        %295 = vmatpush.msra.mxu0 0.0
        %296 = vmatpush.msra.mxu0 0.0
        %297 = vmatpush.msra.mxu0 0.0
        %298 = vmatpush.msra.mxu0 0.0
        %299 = vmatpush.msra.mxu0 0.0
        %300 = vmatpush.msra.mxu0 0.0
        %301 = vmatpush.msra.mxu0 0.0
        %302 = vmatpush.msra.mxu0 0.0
        %303 = vmatpush.msra.mxu0 0.0
        %304 = vmatpush.msra.mxu0 %v230
        %305 = vmatmul.f32.gmra.mxu0 %v247
        %v306 = vpop.f32.mrf.mxu0
        %v307 = vadd.f32 0.0, %v306
        %308 = vdwg.mxu0
        %309 = vmatpush.msra.mxu0 0.0
        %310 = vmatpush.msra.mxu0 0.0
        %311 = vmatpush.msra.mxu0 0.0
        %312 = vmatpush.msra.mxu0 0.0
        %313 = vmatpush.msra.mxu0 0.0
        %314 = vmatpush.msra.mxu0 0.0
        %315 = vmatpush.msra.mxu0 0.0
        %316 = vmatpush.msra.mxu0 0.0
        %317 = vmatpush.msra.mxu0 0.0
        %318 = vmatpush.msra.mxu0 0.0
        %319 = vmatpush.msra.mxu0 0.0
        %320 = vmatpush.msra.mxu0 0.0
        %321 = vmatpush.msra.mxu0 0.0
        %322 = vmatpush.msra.mxu0 0.0
        %323 = vmatpush.msra.mxu0 0.0
        %324 = vmatpush.msra.mxu0 %v231
        %325 = vmatmul.f32.gmra.mxu0 %v247
        %v326 = vpop.f32.mrf.mxu0
        %v327 = vadd.f32 0.0, %v326
        %328 = vdwg.mxu0
        %329 = vmatpush.msra.mxu0 0.0
        %330 = vmatpush.msra.mxu0 0.0
        %331 = vmatpush.msra.mxu0 0.0
        %332 = vmatpush.msra.mxu0 0.0
        %333 = vmatpush.msra.mxu0 0.0
        %334 = vmatpush.msra.mxu0 0.0
        %335 = vmatpush.msra.mxu0 0.0
        %336 = vmatpush.msra.mxu0 0.0
        %337 = vmatpush.msra.mxu0 0.0
        %338 = vmatpush.msra.mxu0 0.0
        %339 = vmatpush.msra.mxu0 0.0
        %340 = vmatpush.msra.mxu0 0.0
        %341 = vmatpush.msra.mxu0 0.0
        %342 = vmatpush.msra.mxu0 0.0
        %343 = vmatpush.msra.mxu0 0.0
        %344 = vmatpush.msra.mxu0 %v232
        %345 = vmatmul.f32.gmra.mxu0 %v247
        %v346 = vpop.f32.mrf.mxu0
        %v347 = vadd.f32 0.0, %v346
        %348 = vdwg.mxu0
        %349 = vmatpush.msra.mxu0 0.0
        %350 = vmatpush.msra.mxu0 0.0
        %351 = vmatpush.msra.mxu0 0.0
        %352 = vmatpush.msra.mxu0 0.0
        %353 = vmatpush.msra.mxu0 0.0
        %354 = vmatpush.msra.mxu0 0.0
        %355 = vmatpush.msra.mxu0 0.0
        %356 = vmatpush.msra.mxu0 0.0
        %357 = vmatpush.msra.mxu0 0.0
        %358 = vmatpush.msra.mxu0 0.0
        %359 = vmatpush.msra.mxu0 0.0
        %360 = vmatpush.msra.mxu0 0.0
        %361 = vmatpush.msra.mxu0 0.0
        %362 = vmatpush.msra.mxu0 0.0
        %363 = vmatpush.msra.mxu0 0.0
        %364 = vmatpush.msra.mxu0 %v233
        %365 = vmatmul.f32.gmra.mxu0 %v247
        %v366 = vpop.f32.mrf.mxu0
        %v367 = vadd.f32 0.0, %v366
        %368 = vdwg.mxu0
        %369 = vmatpush.msra.mxu0 0.0
        %370 = vmatpush.msra.mxu0 0.0
        %371 = vmatpush.msra.mxu0 0.0
        %372 = vmatpush.msra.mxu0 0.0
        %373 = vmatpush.msra.mxu0 0.0
        %374 = vmatpush.msra.mxu0 0.0
        %375 = vmatpush.msra.mxu0 0.0
        %376 = vmatpush.msra.mxu0 0.0
        %377 = vmatpush.msra.mxu0 0.0
        %378 = vmatpush.msra.mxu0 0.0
        %379 = vmatpush.msra.mxu0 0.0
        %380 = vmatpush.msra.mxu0 0.0
        %381 = vmatpush.msra.mxu0 0.0
        %382 = vmatpush.msra.mxu0 0.0
        %383 = vmatpush.msra.mxu0 0.0
        %384 = vmatpush.msra.mxu0 %v234
        %385 = vmatmul.f32.gmra.mxu0 %v247
        %v386 = vpop.f32.mrf.mxu0
        %v387 = vadd.f32 0.0, %v386
        %388 = vdwg.mxu0
        %389 = vmatpush.msra.mxu0 0.0
        %390 = vmatpush.msra.mxu0 0.0
        %391 = vmatpush.msra.mxu0 0.0
        %392 = vmatpush.msra.mxu0 0.0
        %393 = vmatpush.msra.mxu0 0.0
        %394 = vmatpush.msra.mxu0 0.0
        %395 = vmatpush.msra.mxu0 0.0
        %396 = vmatpush.msra.mxu0 0.0
        %397 = vmatpush.msra.mxu0 0.0
        %398 = vmatpush.msra.mxu0 0.0
        %399 = vmatpush.msra.mxu0 0.0
        %400 = vmatpush.msra.mxu0 0.0
        %401 = vmatpush.msra.mxu0 0.0
        %402 = vmatpush.msra.mxu0 0.0
        %403 = vmatpush.msra.mxu0 0.0
        %404 = vmatpush.msra.mxu0 %v235
        %405 = vmatmul.f32.gmra.mxu0 %v247
        %v406 = vpop.f32.mrf.mxu0
        %v407 = vadd.f32 0.0, %v406
        %408 = vdwg.mxu0
        %409 = vmatpush.msra.mxu0 0.0
        %410 = vmatpush.msra.mxu0 0.0
        %411 = vmatpush.msra.mxu0 0.0
        %412 = vmatpush.msra.mxu0 0.0
        %413 = vmatpush.msra.mxu0 0.0
        %414 = vmatpush.msra.mxu0 0.0
        %415 = vmatpush.msra.mxu0 0.0
        %416 = vmatpush.msra.mxu0 0.0
        %417 = vmatpush.msra.mxu0 0.0
        %418 = vmatpush.msra.mxu0 0.0
        %419 = vmatpush.msra.mxu0 0.0
        %420 = vmatpush.msra.mxu0 0.0
        %421 = vmatpush.msra.mxu0 0.0
        %422 = vmatpush.msra.mxu0 0.0
        %423 = vmatpush.msra.mxu0 0.0
        %424 = vmatpush.msra.mxu0 %v226
        %425 = vmatmul.f32.gmra.mxu0 %v247
        %v426 = vpop.f32.mrf.mxu0
        %v427 = vadd.f32 0.0, %v426
        %428 = vdwg.mxu0
        %v430 = vsel %vm245, %v198, 0
        %432 = vmatpush.msra.mxu0 0.0
        %433 = vmatpush.msra.mxu0 0.0
        %434 = vmatpush.msra.mxu0 0.0
        %435 = vmatpush.msra.mxu0 0.0
        %436 = vmatpush.msra.mxu0 0.0
        %437 = vmatpush.msra.mxu0 0.0
        %438 = vmatpush.msra.mxu0 0.0
        %439 = vmatpush.msra.mxu0 0.0
        %440 = vmatpush.msra.mxu0 0.0
        %441 = vmatpush.msra.mxu0 0.0
        %442 = vmatpush.msra.mxu0 0.0
        %443 = vmatpush.msra.mxu0 0.0
        %444 = vmatpush.msra.mxu0 0.0
        %445 = vmatpush.msra.mxu0 0.0
        %446 = vmatpush.msra.mxu0 0.0
        %447 = vmatpush.msra.mxu0 %v189
        %448 = vmatmul.f32.gmra.mxu0 %v430
        %v449 = vpop.f32.mrf.mxu0
        %v450 = vadd.f32 %v267, %v449
        %451 = vdwg.mxu0
        %452 = vmatpush.msra.mxu0 0.0
        %453 = vmatpush.msra.mxu0 0.0
        %454 = vmatpush.msra.mxu0 0.0
        %455 = vmatpush.msra.mxu0 0.0
        %456 = vmatpush.msra.mxu0 0.0
        %457 = vmatpush.msra.mxu0 0.0
        %458 = vmatpush.msra.mxu0 0.0
        %459 = vmatpush.msra.mxu0 0.0
        %460 = vmatpush.msra.mxu0 0.0
        %461 = vmatpush.msra.mxu0 0.0
        %462 = vmatpush.msra.mxu0 0.0
        %463 = vmatpush.msra.mxu0 0.0
        %464 = vmatpush.msra.mxu0 0.0
        %465 = vmatpush.msra.mxu0 0.0
        %466 = vmatpush.msra.mxu0 0.0
        %467 = vmatpush.msra.mxu0 %v190
        %468 = vmatmul.f32.gmra.mxu0 %v430
        %v469 = vpop.f32.mrf.mxu0
        %v470 = vadd.f32 %v287, %v469
        %471 = vdwg.mxu0
        %472 = vmatpush.msra.mxu0 0.0
        %473 = vmatpush.msra.mxu0 0.0
        %474 = vmatpush.msra.mxu0 0.0
        %475 = vmatpush.msra.mxu0 0.0
        %476 = vmatpush.msra.mxu0 0.0
        %477 = vmatpush.msra.mxu0 0.0
        %478 = vmatpush.msra.mxu0 0.0
        %479 = vmatpush.msra.mxu0 0.0
        %480 = vmatpush.msra.mxu0 0.0
        %481 = vmatpush.msra.mxu0 0.0
        %482 = vmatpush.msra.mxu0 0.0
        %483 = vmatpush.msra.mxu0 0.0
        %484 = vmatpush.msra.mxu0 0.0
        %485 = vmatpush.msra.mxu0 0.0
        %486 = vmatpush.msra.mxu0 0.0
        %487 = vmatpush.msra.mxu0 %v191
        %488 = vmatmul.f32.gmra.mxu0 %v430
        %v489 = vpop.f32.mrf.mxu0
        %v490 = vadd.f32 %v307, %v489
        %491 = vdwg.mxu0
        %492 = vmatpush.msra.mxu0 0.0
        %493 = vmatpush.msra.mxu0 0.0
        %494 = vmatpush.msra.mxu0 0.0
        %495 = vmatpush.msra.mxu0 0.0
        %496 = vmatpush.msra.mxu0 0.0
        %497 = vmatpush.msra.mxu0 0.0
        %498 = vmatpush.msra.mxu0 0.0
        %499 = vmatpush.msra.mxu0 0.0
        %500 = vmatpush.msra.mxu0 0.0
        %501 = vmatpush.msra.mxu0 0.0
        %502 = vmatpush.msra.mxu0 0.0
        %503 = vmatpush.msra.mxu0 0.0
        %504 = vmatpush.msra.mxu0 0.0
        %505 = vmatpush.msra.mxu0 0.0
        %506 = vmatpush.msra.mxu0 0.0
        %507 = vmatpush.msra.mxu0 %v192
        %508 = vmatmul.f32.gmra.mxu0 %v430
        %v509 = vpop.f32.mrf.mxu0
        %v510 = vadd.f32 %v327, %v509
        %511 = vdwg.mxu0
        %512 = vmatpush.msra.mxu0 0.0
        %513 = vmatpush.msra.mxu0 0.0
        %514 = vmatpush.msra.mxu0 0.0
        %515 = vmatpush.msra.mxu0 0.0
        %516 = vmatpush.msra.mxu0 0.0
        %517 = vmatpush.msra.mxu0 0.0
        %518 = vmatpush.msra.mxu0 0.0
        %519 = vmatpush.msra.mxu0 0.0
        %520 = vmatpush.msra.mxu0 0.0
        %521 = vmatpush.msra.mxu0 0.0
        %522 = vmatpush.msra.mxu0 0.0
        %523 = vmatpush.msra.mxu0 0.0
        %524 = vmatpush.msra.mxu0 0.0
        %525 = vmatpush.msra.mxu0 0.0
        %526 = vmatpush.msra.mxu0 0.0
        %527 = vmatpush.msra.mxu0 %v193
        %528 = vmatmul.f32.gmra.mxu0 %v430
        %v529 = vpop.f32.mrf.mxu0
        %v530 = vadd.f32 %v347, %v529
        %531 = vdwg.mxu0
        %532 = vmatpush.msra.mxu0 0.0
        %533 = vmatpush.msra.mxu0 0.0
        %534 = vmatpush.msra.mxu0 0.0
        %535 = vmatpush.msra.mxu0 0.0
        %536 = vmatpush.msra.mxu0 0.0
        %537 = vmatpush.msra.mxu0 0.0
        %538 = vmatpush.msra.mxu0 0.0
        %539 = vmatpush.msra.mxu0 0.0
        %540 = vmatpush.msra.mxu0 0.0
        %541 = vmatpush.msra.mxu0 0.0
        %542 = vmatpush.msra.mxu0 0.0
        %543 = vmatpush.msra.mxu0 0.0
        %544 = vmatpush.msra.mxu0 0.0
        %545 = vmatpush.msra.mxu0 0.0
        %546 = vmatpush.msra.mxu0 0.0
        %547 = vmatpush.msra.mxu0 %v194
        %548 = vmatmul.f32.gmra.mxu0 %v430
        %v549 = vpop.f32.mrf.mxu0
        %v550 = vadd.f32 %v367, %v549
        %551 = vdwg.mxu0
        %552 = vmatpush.msra.mxu0 0.0
        %553 = vmatpush.msra.mxu0 0.0
        %554 = vmatpush.msra.mxu0 0.0
        %555 = vmatpush.msra.mxu0 0.0
        %556 = vmatpush.msra.mxu0 0.0
        %557 = vmatpush.msra.mxu0 0.0
        %558 = vmatpush.msra.mxu0 0.0
        %559 = vmatpush.msra.mxu0 0.0
        %560 = vmatpush.msra.mxu0 0.0
        %561 = vmatpush.msra.mxu0 0.0
        %562 = vmatpush.msra.mxu0 0.0
        %563 = vmatpush.msra.mxu0 0.0
        %564 = vmatpush.msra.mxu0 0.0
        %565 = vmatpush.msra.mxu0 0.0
        %566 = vmatpush.msra.mxu0 0.0
        %567 = vmatpush.msra.mxu0 %v195
        %568 = vmatmul.f32.gmra.mxu0 %v430
        %v569 = vpop.f32.mrf.mxu0
        %v570 = vadd.f32 %v387, %v569
        %571 = vdwg.mxu0
        %572 = vmatpush.msra.mxu0 0.0
        %573 = vmatpush.msra.mxu0 0.0
        %574 = vmatpush.msra.mxu0 0.0
        %575 = vmatpush.msra.mxu0 0.0
        %576 = vmatpush.msra.mxu0 0.0
        %577 = vmatpush.msra.mxu0 0.0
        %578 = vmatpush.msra.mxu0 0.0
        %579 = vmatpush.msra.mxu0 0.0
        %580 = vmatpush.msra.mxu0 0.0
        %581 = vmatpush.msra.mxu0 0.0
        %582 = vmatpush.msra.mxu0 0.0
        %583 = vmatpush.msra.mxu0 0.0
        %584 = vmatpush.msra.mxu0 0.0
        %585 = vmatpush.msra.mxu0 0.0
        %586 = vmatpush.msra.mxu0 0.0
        %587 = vmatpush.msra.mxu0 %v196
        %588 = vmatmul.f32.gmra.mxu0 %v430
        %v589 = vpop.f32.mrf.mxu0
        %v590 = vadd.f32 %v407, %v589
        %591 = vdwg.mxu0
        %592 = vmatpush.msra.mxu0 0.0
        %593 = vmatpush.msra.mxu0 0.0
        %594 = vmatpush.msra.mxu0 0.0
        %595 = vmatpush.msra.mxu0 0.0
        %596 = vmatpush.msra.mxu0 0.0
        %597 = vmatpush.msra.mxu0 0.0
        %598 = vmatpush.msra.mxu0 0.0
        %599 = vmatpush.msra.mxu0 0.0
        %600 = vmatpush.msra.mxu0 0.0
        %601 = vmatpush.msra.mxu0 0.0
        %602 = vmatpush.msra.mxu0 0.0
        %603 = vmatpush.msra.mxu0 0.0
        %604 = vmatpush.msra.mxu0 0.0
        %605 = vmatpush.msra.mxu0 0.0
        %606 = vmatpush.msra.mxu0 0.0
        %607 = vmatpush.msra.mxu0 %v197
        %608 = vmatmul.f32.gmra.mxu0 %v430
        %v609 = vpop.f32.mrf.mxu0
        %v610 = vadd.f32 %v427, %v609
        %611 = vdwg.mxu0
        %v612 = vld [vmem:[%s1 + $0x10] sm:$0xff]
        %613 = vrot.lane.b32.xlu0 %v189, 126
        %v614 = vpop.permute.xlu0 %613
        %615 = vrot.lane.b32.xlu0 %v190, 126
        %v616 = vpop.permute.xlu0 %615
        %617 = vrot.lane.b32.xlu0 %v191, 126
        %v618 = vpop.permute.xlu0 %617
        %619 = vrot.lane.b32.xlu0 %v192, 126
        %v620 = vpop.permute.xlu0 %619
        %621 = vrot.lane.b32.xlu0 %v193, 126
        %v622 = vpop.permute.xlu0 %621
        %623 = vrot.lane.b32.xlu0 %v194, 126
        %v624 = vpop.permute.xlu0 %623
        %625 = vrot.lane.b32.xlu0 %v195, 126
        %v626 = vpop.permute.xlu0 %625
        %627 = vrot.lane.b32.xlu0 %v196, 126
        %v628 = vpop.permute.xlu0 %627
        %629 = vrot.lane.b32.xlu0 %v197, 126
        %v630 = vpop.permute.xlu0 %629
        %vm631 = vcmask 1031168
        %v632 = vsel %vm631, %v614, %v616
        %v633 = vsel %vm631, %v616, %v618
        %v634 = vsel %vm631, %v618, %v620
        %v635 = vsel %vm631, %v620, %v622
        %v636 = vsel %vm631, %v622, %v624
        %v637 = vsel %vm631, %v624, %v626
        %v638 = vsel %vm631, %v626, %v628
        %v639 = vsel %vm631, %v628, %v630
        %v650 = vsel %vm245, %v612, 0
        %652 = vmatpush.msra.mxu0 0.0
        %653 = vmatpush.msra.mxu0 0.0
        %654 = vmatpush.msra.mxu0 0.0
        %655 = vmatpush.msra.mxu0 0.0
        %656 = vmatpush.msra.mxu0 0.0
        %657 = vmatpush.msra.mxu0 0.0
        %658 = vmatpush.msra.mxu0 0.0
        %659 = vmatpush.msra.mxu0 0.0
        %660 = vmatpush.msra.mxu0 0.0
        %661 = vmatpush.msra.mxu0 0.0
        %662 = vmatpush.msra.mxu0 0.0
        %663 = vmatpush.msra.mxu0 0.0
        %664 = vmatpush.msra.mxu0 0.0
        %665 = vmatpush.msra.mxu0 0.0
        %666 = vmatpush.msra.mxu0 0.0
        %667 = vmatpush.msra.mxu0 %v632
        %668 = vmatmul.f32.gmra.mxu0 %v650
        %v669 = vpop.f32.mrf.mxu0
        %v670 = vadd.f32 0.0, %v669
        %671 = vdwg.mxu0
        %672 = vmatpush.msra.mxu0 0.0
        %673 = vmatpush.msra.mxu0 0.0
        %674 = vmatpush.msra.mxu0 0.0
        %675 = vmatpush.msra.mxu0 0.0
        %676 = vmatpush.msra.mxu0 0.0
        %677 = vmatpush.msra.mxu0 0.0
        %678 = vmatpush.msra.mxu0 0.0
        %679 = vmatpush.msra.mxu0 0.0
        %680 = vmatpush.msra.mxu0 0.0
        %681 = vmatpush.msra.mxu0 0.0
        %682 = vmatpush.msra.mxu0 0.0
        %683 = vmatpush.msra.mxu0 0.0
        %684 = vmatpush.msra.mxu0 0.0
        %685 = vmatpush.msra.mxu0 0.0
        %686 = vmatpush.msra.mxu0 0.0
        %687 = vmatpush.msra.mxu0 %v633
        %688 = vmatmul.f32.gmra.mxu0 %v650
        %v689 = vpop.f32.mrf.mxu0
        %v690 = vadd.f32 0.0, %v689
        %691 = vdwg.mxu0
        %692 = vmatpush.msra.mxu0 0.0
        %693 = vmatpush.msra.mxu0 0.0
        %694 = vmatpush.msra.mxu0 0.0
        %695 = vmatpush.msra.mxu0 0.0
        %696 = vmatpush.msra.mxu0 0.0
        %697 = vmatpush.msra.mxu0 0.0
        %698 = vmatpush.msra.mxu0 0.0
        %699 = vmatpush.msra.mxu0 0.0
        %700 = vmatpush.msra.mxu0 0.0
        %701 = vmatpush.msra.mxu0 0.0
        %702 = vmatpush.msra.mxu0 0.0
        %703 = vmatpush.msra.mxu0 0.0
        %704 = vmatpush.msra.mxu0 0.0
        %705 = vmatpush.msra.mxu0 0.0
        %706 = vmatpush.msra.mxu0 0.0
        %707 = vmatpush.msra.mxu0 %v634
        %708 = vmatmul.f32.gmra.mxu0 %v650
        %v709 = vpop.f32.mrf.mxu0
        %v710 = vadd.f32 0.0, %v709
        %711 = vdwg.mxu0
        %712 = vmatpush.msra.mxu0 0.0
        %713 = vmatpush.msra.mxu0 0.0
        %714 = vmatpush.msra.mxu0 0.0
        %715 = vmatpush.msra.mxu0 0.0
        %716 = vmatpush.msra.mxu0 0.0
        %717 = vmatpush.msra.mxu0 0.0
        %718 = vmatpush.msra.mxu0 0.0
        %719 = vmatpush.msra.mxu0 0.0
        %720 = vmatpush.msra.mxu0 0.0
        %721 = vmatpush.msra.mxu0 0.0
        %722 = vmatpush.msra.mxu0 0.0
        %723 = vmatpush.msra.mxu0 0.0
        %724 = vmatpush.msra.mxu0 0.0
        %725 = vmatpush.msra.mxu0 0.0
        %726 = vmatpush.msra.mxu0 0.0
        %727 = vmatpush.msra.mxu0 %v635
        %728 = vmatmul.f32.gmra.mxu0 %v650
        %v729 = vpop.f32.mrf.mxu0
        %v730 = vadd.f32 0.0, %v729
        %731 = vdwg.mxu0
        %732 = vmatpush.msra.mxu0 0.0
        %733 = vmatpush.msra.mxu0 0.0
        %734 = vmatpush.msra.mxu0 0.0
        %735 = vmatpush.msra.mxu0 0.0
        %736 = vmatpush.msra.mxu0 0.0
        %737 = vmatpush.msra.mxu0 0.0
        %738 = vmatpush.msra.mxu0 0.0
        %739 = vmatpush.msra.mxu0 0.0
        %740 = vmatpush.msra.mxu0 0.0
        %741 = vmatpush.msra.mxu0 0.0
        %742 = vmatpush.msra.mxu0 0.0
        %743 = vmatpush.msra.mxu0 0.0
        %744 = vmatpush.msra.mxu0 0.0
        %745 = vmatpush.msra.mxu0 0.0
        %746 = vmatpush.msra.mxu0 0.0
        %747 = vmatpush.msra.mxu0 %v636
        %748 = vmatmul.f32.gmra.mxu0 %v650
        %v749 = vpop.f32.mrf.mxu0
        %v750 = vadd.f32 0.0, %v749
        %751 = vdwg.mxu0
        %752 = vmatpush.msra.mxu0 0.0
        %753 = vmatpush.msra.mxu0 0.0
        %754 = vmatpush.msra.mxu0 0.0
        %755 = vmatpush.msra.mxu0 0.0
        %756 = vmatpush.msra.mxu0 0.0
        %757 = vmatpush.msra.mxu0 0.0
        %758 = vmatpush.msra.mxu0 0.0
        %759 = vmatpush.msra.mxu0 0.0
        %760 = vmatpush.msra.mxu0 0.0
        %761 = vmatpush.msra.mxu0 0.0
        %762 = vmatpush.msra.mxu0 0.0
        %763 = vmatpush.msra.mxu0 0.0
        %764 = vmatpush.msra.mxu0 0.0
        %765 = vmatpush.msra.mxu0 0.0
        %766 = vmatpush.msra.mxu0 0.0
        %767 = vmatpush.msra.mxu0 %v637
        %768 = vmatmul.f32.gmra.mxu0 %v650
        %v769 = vpop.f32.mrf.mxu0
        %v770 = vadd.f32 0.0, %v769
        %771 = vdwg.mxu0
        %772 = vmatpush.msra.mxu0 0.0
        %773 = vmatpush.msra.mxu0 0.0
        %774 = vmatpush.msra.mxu0 0.0
        %775 = vmatpush.msra.mxu0 0.0
        %776 = vmatpush.msra.mxu0 0.0
        %777 = vmatpush.msra.mxu0 0.0
        %778 = vmatpush.msra.mxu0 0.0
        %779 = vmatpush.msra.mxu0 0.0
        %780 = vmatpush.msra.mxu0 0.0
        %781 = vmatpush.msra.mxu0 0.0
        %782 = vmatpush.msra.mxu0 0.0
        %783 = vmatpush.msra.mxu0 0.0
        %784 = vmatpush.msra.mxu0 0.0
        %785 = vmatpush.msra.mxu0 0.0
        %786 = vmatpush.msra.mxu0 0.0
        %787 = vmatpush.msra.mxu0 %v638
        %788 = vmatmul.f32.gmra.mxu0 %v650
        %v789 = vpop.f32.mrf.mxu0
        %v790 = vadd.f32 0.0, %v789
        %791 = vdwg.mxu0
        %792 = vmatpush.msra.mxu0 0.0
        %793 = vmatpush.msra.mxu0 0.0
        %794 = vmatpush.msra.mxu0 0.0
        %795 = vmatpush.msra.mxu0 0.0
        %796 = vmatpush.msra.mxu0 0.0
        %797 = vmatpush.msra.mxu0 0.0
        %798 = vmatpush.msra.mxu0 0.0
        %799 = vmatpush.msra.mxu0 0.0
        %800 = vmatpush.msra.mxu0 0.0
        %801 = vmatpush.msra.mxu0 0.0
        %802 = vmatpush.msra.mxu0 0.0
        %803 = vmatpush.msra.mxu0 0.0
        %804 = vmatpush.msra.mxu0 0.0
        %805 = vmatpush.msra.mxu0 0.0
        %806 = vmatpush.msra.mxu0 0.0
        %807 = vmatpush.msra.mxu0 %v639
        %808 = vmatmul.f32.gmra.mxu0 %v650
        %v809 = vpop.f32.mrf.mxu0
        %v810 = vadd.f32 0.0, %v809
        %811 = vdwg.mxu0
        %812 = vmatpush.msra.mxu0 0.0
        %813 = vmatpush.msra.mxu0 0.0
        %814 = vmatpush.msra.mxu0 0.0
        %815 = vmatpush.msra.mxu0 0.0
        %816 = vmatpush.msra.mxu0 0.0
        %817 = vmatpush.msra.mxu0 0.0
        %818 = vmatpush.msra.mxu0 0.0
        %819 = vmatpush.msra.mxu0 0.0
        %820 = vmatpush.msra.mxu0 0.0
        %821 = vmatpush.msra.mxu0 0.0
        %822 = vmatpush.msra.mxu0 0.0
        %823 = vmatpush.msra.mxu0 0.0
        %824 = vmatpush.msra.mxu0 0.0
        %825 = vmatpush.msra.mxu0 0.0
        %826 = vmatpush.msra.mxu0 0.0
        %827 = vmatpush.msra.mxu0 %v630
        %828 = vmatmul.f32.gmra.mxu0 %v650
        %v829 = vpop.f32.mrf.mxu0
        %v830 = vadd.f32 0.0, %v829
        %831 = vdwg.mxu0
        %v832 = vadd.f32 %v450, %v670
        %v833 = vadd.f32 %v470, %v690
        %v834 = vadd.f32 %v490, %v710
        %v835 = vadd.f32 %v510, %v730
        %v836 = vadd.f32 %v530, %v750
        %v837 = vadd.f32 %v550, %v770
        %v838 = vadd.f32 %v570, %v790
        %v839 = vadd.f32 %v590, %v810
        %v840 = vadd.f32 %v610, %v830
        %v841 = vld [vmem:[%s1 + $0x18] sm:$0xff]
        %842 = vrot.lane.b32.xlu0 %v189, 94
        %v843 = vpop.permute.xlu0 %842
        %844 = vrot.lane.b32.xlu0 %v190, 94
        %v845 = vpop.permute.xlu0 %844
        %846 = vrot.lane.b32.xlu0 %v191, 94
        %v847 = vpop.permute.xlu0 %846
        %848 = vrot.lane.b32.xlu0 %v192, 94
        %v849 = vpop.permute.xlu0 %848
        %850 = vrot.lane.b32.xlu0 %v193, 94
        %v851 = vpop.permute.xlu0 %850
        %852 = vrot.lane.b32.xlu0 %v194, 94
        %v853 = vpop.permute.xlu0 %852
        %854 = vrot.lane.b32.xlu0 %v195, 94
        %v855 = vpop.permute.xlu0 %854
        %856 = vrot.lane.b32.xlu0 %v196, 94
        %v857 = vpop.permute.xlu0 %856
        %858 = vrot.lane.b32.xlu0 %v197, 94
        %v859 = vpop.permute.xlu0 %858
        %vm860 = vcmask 769024
        %v861 = vsel %vm860, %v843, %v845
        %v862 = vsel %vm860, %v845, %v847
        %v863 = vsel %vm860, %v847, %v849
        %v864 = vsel %vm860, %v849, %v851
        %v865 = vsel %vm860, %v851, %v853
        %v866 = vsel %vm860, %v853, %v855
        %v867 = vsel %vm860, %v855, %v857
        %v868 = vsel %vm860, %v857, %v859
        %v879 = vsel %vm245, %v841, 0
        %881 = vmatpush.msra.mxu0 0.0
        %882 = vmatpush.msra.mxu0 0.0
        %883 = vmatpush.msra.mxu0 0.0
        %884 = vmatpush.msra.mxu0 0.0
        %885 = vmatpush.msra.mxu0 0.0
        %886 = vmatpush.msra.mxu0 0.0
        %887 = vmatpush.msra.mxu0 0.0
        %888 = vmatpush.msra.mxu0 0.0
        %889 = vmatpush.msra.mxu0 0.0
        %890 = vmatpush.msra.mxu0 0.0
        %891 = vmatpush.msra.mxu0 0.0
        %892 = vmatpush.msra.mxu0 0.0
        %893 = vmatpush.msra.mxu0 0.0
        %894 = vmatpush.msra.mxu0 0.0
        %895 = vmatpush.msra.mxu0 0.0
        %896 = vmatpush.msra.mxu0 %v861
        %897 = vmatmul.f32.gmra.mxu0 %v879
        %v898 = vpop.f32.mrf.mxu0
        %v899 = vadd.f32 0.0, %v898
        %900 = vdwg.mxu0
        %901 = vmatpush.msra.mxu0 0.0
        %902 = vmatpush.msra.mxu0 0.0
        %903 = vmatpush.msra.mxu0 0.0
        %904 = vmatpush.msra.mxu0 0.0
        %905 = vmatpush.msra.mxu0 0.0
        %906 = vmatpush.msra.mxu0 0.0
        %907 = vmatpush.msra.mxu0 0.0
        %908 = vmatpush.msra.mxu0 0.0
        %909 = vmatpush.msra.mxu0 0.0
        %910 = vmatpush.msra.mxu0 0.0
        %911 = vmatpush.msra.mxu0 0.0
        %912 = vmatpush.msra.mxu0 0.0
        %913 = vmatpush.msra.mxu0 0.0
        %914 = vmatpush.msra.mxu0 0.0
        %915 = vmatpush.msra.mxu0 0.0
        %916 = vmatpush.msra.mxu0 %v862
        %917 = vmatmul.f32.gmra.mxu0 %v879
        %v918 = vpop.f32.mrf.mxu0
        %v919 = vadd.f32 0.0, %v918
        %920 = vdwg.mxu0
        %921 = vmatpush.msra.mxu0 0.0
        %922 = vmatpush.msra.mxu0 0.0
        %923 = vmatpush.msra.mxu0 0.0
        %924 = vmatpush.msra.mxu0 0.0
        %925 = vmatpush.msra.mxu0 0.0
        %926 = vmatpush.msra.mxu0 0.0
        %927 = vmatpush.msra.mxu0 0.0
        %928 = vmatpush.msra.mxu0 0.0
        %929 = vmatpush.msra.mxu0 0.0
        %930 = vmatpush.msra.mxu0 0.0
        %931 = vmatpush.msra.mxu0 0.0
        %932 = vmatpush.msra.mxu0 0.0
        %933 = vmatpush.msra.mxu0 0.0
        %934 = vmatpush.msra.mxu0 0.0
        %935 = vmatpush.msra.mxu0 0.0
        %936 = vmatpush.msra.mxu0 %v863
        %937 = vmatmul.f32.gmra.mxu0 %v879
        %v938 = vpop.f32.mrf.mxu0
        %v939 = vadd.f32 0.0, %v938
        %940 = vdwg.mxu0
        %941 = vmatpush.msra.mxu0 0.0
        %942 = vmatpush.msra.mxu0 0.0
        %943 = vmatpush.msra.mxu0 0.0
        %944 = vmatpush.msra.mxu0 0.0
        %945 = vmatpush.msra.mxu0 0.0
        %946 = vmatpush.msra.mxu0 0.0
        %947 = vmatpush.msra.mxu0 0.0
        %948 = vmatpush.msra.mxu0 0.0
        %949 = vmatpush.msra.mxu0 0.0
        %950 = vmatpush.msra.mxu0 0.0
        %951 = vmatpush.msra.mxu0 0.0
        %952 = vmatpush.msra.mxu0 0.0
        %953 = vmatpush.msra.mxu0 0.0
        %954 = vmatpush.msra.mxu0 0.0
        %955 = vmatpush.msra.mxu0 0.0
        %956 = vmatpush.msra.mxu0 %v864
        %957 = vmatmul.f32.gmra.mxu0 %v879
        %v958 = vpop.f32.mrf.mxu0
        %v959 = vadd.f32 0.0, %v958
        %960 = vdwg.mxu0
        %961 = vmatpush.msra.mxu0 0.0
        %962 = vmatpush.msra.mxu0 0.0
        %963 = vmatpush.msra.mxu0 0.0
        %964 = vmatpush.msra.mxu0 0.0
        %965 = vmatpush.msra.mxu0 0.0
        %966 = vmatpush.msra.mxu0 0.0
        %967 = vmatpush.msra.mxu0 0.0
        %968 = vmatpush.msra.mxu0 0.0
        %969 = vmatpush.msra.mxu0 0.0
        %970 = vmatpush.msra.mxu0 0.0
        %971 = vmatpush.msra.mxu0 0.0
        %972 = vmatpush.msra.mxu0 0.0
        %973 = vmatpush.msra.mxu0 0.0
        %974 = vmatpush.msra.mxu0 0.0
        %975 = vmatpush.msra.mxu0 0.0
        %976 = vmatpush.msra.mxu0 %v865
        %977 = vmatmul.f32.gmra.mxu0 %v879
        %v978 = vpop.f32.mrf.mxu0
        %v979 = vadd.f32 0.0, %v978
        %980 = vdwg.mxu0
        %981 = vmatpush.msra.mxu0 0.0
        %982 = vmatpush.msra.mxu0 0.0
        %983 = vmatpush.msra.mxu0 0.0
        %984 = vmatpush.msra.mxu0 0.0
        %985 = vmatpush.msra.mxu0 0.0
        %986 = vmatpush.msra.mxu0 0.0
        %987 = vmatpush.msra.mxu0 0.0
        %988 = vmatpush.msra.mxu0 0.0
        %989 = vmatpush.msra.mxu0 0.0
        %990 = vmatpush.msra.mxu0 0.0
        %991 = vmatpush.msra.mxu0 0.0
        %992 = vmatpush.msra.mxu0 0.0
        %993 = vmatpush.msra.mxu0 0.0
        %994 = vmatpush.msra.mxu0 0.0
        %995 = vmatpush.msra.mxu0 0.0
        %996 = vmatpush.msra.mxu0 %v866
        %997 = vmatmul.f32.gmra.mxu0 %v879
        %v998 = vpop.f32.mrf.mxu0
        %v999 = vadd.f32 0.0, %v998
        %1000 = vdwg.mxu0
        %1001 = vmatpush.msra.mxu0 0.0
        %1002 = vmatpush.msra.mxu0 0.0
        %1003 = vmatpush.msra.mxu0 0.0
        %1004 = vmatpush.msra.mxu0 0.0
        %1005 = vmatpush.msra.mxu0 0.0
        %1006 = vmatpush.msra.mxu0 0.0
        %1007 = vmatpush.msra.mxu0 0.0
        %1008 = vmatpush.msra.mxu0 0.0
        %1009 = vmatpush.msra.mxu0 0.0
        %1010 = vmatpush.msra.mxu0 0.0
        %1011 = vmatpush.msra.mxu0 0.0
        %1012 = vmatpush.msra.mxu0 0.0
        %1013 = vmatpush.msra.mxu0 0.0
        %1014 = vmatpush.msra.mxu0 0.0
        %1015 = vmatpush.msra.mxu0 0.0
        %1016 = vmatpush.msra.mxu0 %v867
        %1017 = vmatmul.f32.gmra.mxu0 %v879
        %v1018 = vpop.f32.mrf.mxu0
        %v1019 = vadd.f32 0.0, %v1018
        %1020 = vdwg.mxu0
        %1021 = vmatpush.msra.mxu0 0.0
        %1022 = vmatpush.msra.mxu0 0.0
        %1023 = vmatpush.msra.mxu0 0.0
        %1024 = vmatpush.msra.mxu0 0.0
        %1025 = vmatpush.msra.mxu0 0.0
        %1026 = vmatpush.msra.mxu0 0.0
        %1027 = vmatpush.msra.mxu0 0.0
        %1028 = vmatpush.msra.mxu0 0.0
        %1029 = vmatpush.msra.mxu0 0.0
        %1030 = vmatpush.msra.mxu0 0.0
        %1031 = vmatpush.msra.mxu0 0.0
        %1032 = vmatpush.msra.mxu0 0.0
        %1033 = vmatpush.msra.mxu0 0.0
        %1034 = vmatpush.msra.mxu0 0.0
        %1035 = vmatpush.msra.mxu0 0.0
        %1036 = vmatpush.msra.mxu0 %v868
        %1037 = vmatmul.f32.gmra.mxu0 %v879
        %v1038 = vpop.f32.mrf.mxu0
        %v1039 = vadd.f32 0.0, %v1038
        %1040 = vdwg.mxu0
        %1041 = vmatpush.msra.mxu0 0.0
        %1042 = vmatpush.msra.mxu0 0.0
        %1043 = vmatpush.msra.mxu0 0.0
        %1044 = vmatpush.msra.mxu0 0.0
        %1045 = vmatpush.msra.mxu0 0.0
        %1046 = vmatpush.msra.mxu0 0.0
        %1047 = vmatpush.msra.mxu0 0.0
        %1048 = vmatpush.msra.mxu0 0.0
        %1049 = vmatpush.msra.mxu0 0.0
        %1050 = vmatpush.msra.mxu0 0.0
        %1051 = vmatpush.msra.mxu0 0.0
        %1052 = vmatpush.msra.mxu0 0.0
        %1053 = vmatpush.msra.mxu0 0.0
        %1054 = vmatpush.msra.mxu0 0.0
        %1055 = vmatpush.msra.mxu0 0.0
        %1056 = vmatpush.msra.mxu0 %v859
        %1057 = vmatmul.f32.gmra.mxu0 %v879
        %v1058 = vpop.f32.mrf.mxu0
        %v1059 = vadd.f32 0.0, %v1058
        %1060 = vdwg.mxu0
        %v1061 = vadd.f32 %v832, %v899
        %v1062 = vadd.f32 %v833, %v919
        %v1063 = vadd.f32 %v834, %v939
        %v1064 = vadd.f32 %v835, %v959
        %v1065 = vadd.f32 %v836, %v979
        %v1066 = vadd.f32 %v837, %v999
        %v1067 = vadd.f32 %v838, %v1019
        %v1068 = vadd.f32 %v839, %v1039
        %v1069 = vadd.f32 %v840, %v1059
        %v1070 = vld [vmem:[%s1 + $0x20] sm:$0xff]
        %1071 = vrot.lane.b32.xlu0 %v189, 93
        %v1072 = vpop.permute.xlu0 %1071
        %1073 = vrot.lane.b32.xlu0 %v190, 93
        %v1074 = vpop.permute.xlu0 %1073
        %1075 = vrot.lane.b32.xlu0 %v191, 93
        %v1076 = vpop.permute.xlu0 %1075
        %1077 = vrot.lane.b32.xlu0 %v192, 93
        %v1078 = vpop.permute.xlu0 %1077
        %1079 = vrot.lane.b32.xlu0 %v193, 93
        %v1080 = vpop.permute.xlu0 %1079
        %1081 = vrot.lane.b32.xlu0 %v194, 93
        %v1082 = vpop.permute.xlu0 %1081
        %1083 = vrot.lane.b32.xlu0 %v195, 93
        %v1084 = vpop.permute.xlu0 %1083
        %1085 = vrot.lane.b32.xlu0 %v196, 93
        %v1086 = vpop.permute.xlu0 %1085
        %1087 = vrot.lane.b32.xlu0 %v197, 93
        %v1088 = vpop.permute.xlu0 %1087
        %vm1089 = vcmask 760832
        %v1090 = vsel %vm1089, %v1072, %v1074
        %v1091 = vsel %vm1089, %v1074, %v1076
        %v1092 = vsel %vm1089, %v1076, %v1078
        %v1093 = vsel %vm1089, %v1078, %v1080
        %v1094 = vsel %vm1089, %v1080, %v1082
        %v1095 = vsel %vm1089, %v1082, %v1084
        %v1096 = vsel %vm1089, %v1084, %v1086
        %v1097 = vsel %vm1089, %v1086, %v1088
        %v1108 = vsel %vm245, %v1070, 0
        %1110 = vmatpush.msra.mxu0 0.0
        %1111 = vmatpush.msra.mxu0 0.0
        %1112 = vmatpush.msra.mxu0 0.0
        %1113 = vmatpush.msra.mxu0 0.0
        %1114 = vmatpush.msra.mxu0 0.0
        %1115 = vmatpush.msra.mxu0 0.0
        %1116 = vmatpush.msra.mxu0 0.0
        %1117 = vmatpush.msra.mxu0 0.0
        %1118 = vmatpush.msra.mxu0 0.0
        %1119 = vmatpush.msra.mxu0 0.0
        %1120 = vmatpush.msra.mxu0 0.0
        %1121 = vmatpush.msra.mxu0 0.0
        %1122 = vmatpush.msra.mxu0 0.0
        %1123 = vmatpush.msra.mxu0 0.0
        %1124 = vmatpush.msra.mxu0 0.0
        %1125 = vmatpush.msra.mxu0 %v1090
        %1126 = vmatmul.f32.gmra.mxu0 %v1108
        %v1127 = vpop.f32.mrf.mxu0
        %v1128 = vadd.f32 0.0, %v1127
        %1129 = vdwg.mxu0
        %1130 = vmatpush.msra.mxu0 0.0
        %1131 = vmatpush.msra.mxu0 0.0
        %1132 = vmatpush.msra.mxu0 0.0
        %1133 = vmatpush.msra.mxu0 0.0
        %1134 = vmatpush.msra.mxu0 0.0
        %1135 = vmatpush.msra.mxu0 0.0
        %1136 = vmatpush.msra.mxu0 0.0
        %1137 = vmatpush.msra.mxu0 0.0
        %1138 = vmatpush.msra.mxu0 0.0
        %1139 = vmatpush.msra.mxu0 0.0
        %1140 = vmatpush.msra.mxu0 0.0
        %1141 = vmatpush.msra.mxu0 0.0
        %1142 = vmatpush.msra.mxu0 0.0
        %1143 = vmatpush.msra.mxu0 0.0
        %1144 = vmatpush.msra.mxu0 0.0
        %1145 = vmatpush.msra.mxu0 %v1091
        %1146 = vmatmul.f32.gmra.mxu0 %v1108
        %v1147 = vpop.f32.mrf.mxu0
        %v1148 = vadd.f32 0.0, %v1147
        %1149 = vdwg.mxu0
        %1150 = vmatpush.msra.mxu0 0.0
        %1151 = vmatpush.msra.mxu0 0.0
        %1152 = vmatpush.msra.mxu0 0.0
        %1153 = vmatpush.msra.mxu0 0.0
        %1154 = vmatpush.msra.mxu0 0.0
        %1155 = vmatpush.msra.mxu0 0.0
        %1156 = vmatpush.msra.mxu0 0.0
        %1157 = vmatpush.msra.mxu0 0.0
        %1158 = vmatpush.msra.mxu0 0.0
        %1159 = vmatpush.msra.mxu0 0.0
        %1160 = vmatpush.msra.mxu0 0.0
        %1161 = vmatpush.msra.mxu0 0.0
        %1162 = vmatpush.msra.mxu0 0.0
        %1163 = vmatpush.msra.mxu0 0.0
        %1164 = vmatpush.msra.mxu0 0.0
        %1165 = vmatpush.msra.mxu0 %v1092
        %1166 = vmatmul.f32.gmra.mxu0 %v1108
        %v1167 = vpop.f32.mrf.mxu0
        %v1168 = vadd.f32 0.0, %v1167
        %1169 = vdwg.mxu0
        %1170 = vmatpush.msra.mxu0 0.0
        %1171 = vmatpush.msra.mxu0 0.0
        %1172 = vmatpush.msra.mxu0 0.0
        %1173 = vmatpush.msra.mxu0 0.0
        %1174 = vmatpush.msra.mxu0 0.0
        %1175 = vmatpush.msra.mxu0 0.0
        %1176 = vmatpush.msra.mxu0 0.0
        %1177 = vmatpush.msra.mxu0 0.0
        %1178 = vmatpush.msra.mxu0 0.0
        %1179 = vmatpush.msra.mxu0 0.0
        %1180 = vmatpush.msra.mxu0 0.0
        %1181 = vmatpush.msra.mxu0 0.0
        %1182 = vmatpush.msra.mxu0 0.0
        %1183 = vmatpush.msra.mxu0 0.0
        %1184 = vmatpush.msra.mxu0 0.0
        %1185 = vmatpush.msra.mxu0 %v1093
        %1186 = vmatmul.f32.gmra.mxu0 %v1108
        %v1187 = vpop.f32.mrf.mxu0
        %v1188 = vadd.f32 0.0, %v1187
        %1189 = vdwg.mxu0
        %1190 = vmatpush.msra.mxu0 0.0
        %1191 = vmatpush.msra.mxu0 0.0
        %1192 = vmatpush.msra.mxu0 0.0
        %1193 = vmatpush.msra.mxu0 0.0
        %1194 = vmatpush.msra.mxu0 0.0
        %1195 = vmatpush.msra.mxu0 0.0
        %1196 = vmatpush.msra.mxu0 0.0
        %1197 = vmatpush.msra.mxu0 0.0
        %1198 = vmatpush.msra.mxu0 0.0
        %1199 = vmatpush.msra.mxu0 0.0
        %1200 = vmatpush.msra.mxu0 0.0
        %1201 = vmatpush.msra.mxu0 0.0
        %1202 = vmatpush.msra.mxu0 0.0
        %1203 = vmatpush.msra.mxu0 0.0
        %1204 = vmatpush.msra.mxu0 0.0
        %1205 = vmatpush.msra.mxu0 %v1094
        %1206 = vmatmul.f32.gmra.mxu0 %v1108
        %v1207 = vpop.f32.mrf.mxu0
        %v1208 = vadd.f32 0.0, %v1207
        %1209 = vdwg.mxu0
        %1210 = vmatpush.msra.mxu0 0.0
        %1211 = vmatpush.msra.mxu0 0.0
        %1212 = vmatpush.msra.mxu0 0.0
        %1213 = vmatpush.msra.mxu0 0.0
        %1214 = vmatpush.msra.mxu0 0.0
        %1215 = vmatpush.msra.mxu0 0.0
        %1216 = vmatpush.msra.mxu0 0.0
        %1217 = vmatpush.msra.mxu0 0.0
        %1218 = vmatpush.msra.mxu0 0.0
        %1219 = vmatpush.msra.mxu0 0.0
        %1220 = vmatpush.msra.mxu0 0.0
        %1221 = vmatpush.msra.mxu0 0.0
        %1222 = vmatpush.msra.mxu0 0.0
        %1223 = vmatpush.msra.mxu0 0.0
        %1224 = vmatpush.msra.mxu0 0.0
        %1225 = vmatpush.msra.mxu0 %v1095
        %1226 = vmatmul.f32.gmra.mxu0 %v1108
        %v1227 = vpop.f32.mrf.mxu0
        %v1228 = vadd.f32 0.0, %v1227
        %1229 = vdwg.mxu0
        %1230 = vmatpush.msra.mxu0 0.0
        %1231 = vmatpush.msra.mxu0 0.0
        %1232 = vmatpush.msra.mxu0 0.0
        %1233 = vmatpush.msra.mxu0 0.0
        %1234 = vmatpush.msra.mxu0 0.0
        %1235 = vmatpush.msra.mxu0 0.0
        %1236 = vmatpush.msra.mxu0 0.0
        %1237 = vmatpush.msra.mxu0 0.0
        %1238 = vmatpush.msra.mxu0 0.0
        %1239 = vmatpush.msra.mxu0 0.0
        %1240 = vmatpush.msra.mxu0 0.0
        %1241 = vmatpush.msra.mxu0 0.0
        %1242 = vmatpush.msra.mxu0 0.0
        %1243 = vmatpush.msra.mxu0 0.0
        %1244 = vmatpush.msra.mxu0 0.0
        %1245 = vmatpush.msra.mxu0 %v1096
        %1246 = vmatmul.f32.gmra.mxu0 %v1108
        %v1247 = vpop.f32.mrf.mxu0
        %v1248 = vadd.f32 0.0, %v1247
        %1249 = vdwg.mxu0
        %1250 = vmatpush.msra.mxu0 0.0
        %1251 = vmatpush.msra.mxu0 0.0
        %1252 = vmatpush.msra.mxu0 0.0
        %1253 = vmatpush.msra.mxu0 0.0
        %1254 = vmatpush.msra.mxu0 0.0
        %1255 = vmatpush.msra.mxu0 0.0
        %1256 = vmatpush.msra.mxu0 0.0
        %1257 = vmatpush.msra.mxu0 0.0
        %1258 = vmatpush.msra.mxu0 0.0
        %1259 = vmatpush.msra.mxu0 0.0
        %1260 = vmatpush.msra.mxu0 0.0
        %1261 = vmatpush.msra.mxu0 0.0
        %1262 = vmatpush.msra.mxu0 0.0
        %1263 = vmatpush.msra.mxu0 0.0
        %1264 = vmatpush.msra.mxu0 0.0
        %1265 = vmatpush.msra.mxu0 %v1097
        %1266 = vmatmul.f32.gmra.mxu0 %v1108
        %v1267 = vpop.f32.mrf.mxu0
        %v1268 = vadd.f32 0.0, %v1267
        %1269 = vdwg.mxu0
        %1270 = vmatpush.msra.mxu0 0.0
        %1271 = vmatpush.msra.mxu0 0.0
        %1272 = vmatpush.msra.mxu0 0.0
        %1273 = vmatpush.msra.mxu0 0.0
        %1274 = vmatpush.msra.mxu0 0.0
        %1275 = vmatpush.msra.mxu0 0.0
        %1276 = vmatpush.msra.mxu0 0.0
        %1277 = vmatpush.msra.mxu0 0.0
        %1278 = vmatpush.msra.mxu0 0.0
        %1279 = vmatpush.msra.mxu0 0.0
        %1280 = vmatpush.msra.mxu0 0.0
        %1281 = vmatpush.msra.mxu0 0.0
        %1282 = vmatpush.msra.mxu0 0.0
        %1283 = vmatpush.msra.mxu0 0.0
        %1284 = vmatpush.msra.mxu0 0.0
        %1285 = vmatpush.msra.mxu0 %v1088
        %1286 = vmatmul.f32.gmra.mxu0 %v1108
        %v1287 = vpop.f32.mrf.mxu0
        %v1288 = vadd.f32 0.0, %v1287
        %1289 = vdwg.mxu0
        %v1290 = vadd.f32 %v1061, %v1128
        %v1291 = vadd.f32 %v1062, %v1148
        %v1292 = vadd.f32 %v1063, %v1168
        %v1293 = vadd.f32 %v1064, %v1188
        %v1294 = vadd.f32 %v1065, %v1208
        %v1295 = vadd.f32 %v1066, %v1228
        %v1296 = vadd.f32 %v1067, %v1248
        %v1297 = vadd.f32 %v1068, %v1268
        %v1298 = vadd.f32 %v1069, %v1288
        %v1299 = vld [vmem:[%s1 + $0x28] sm:$0xff]
        %1300 = vrot.lane.b32.xlu0 %v189, 92
        %v1301 = vpop.permute.xlu0 %1300
        %1302 = vrot.lane.b32.xlu0 %v190, 92
        %v1303 = vpop.permute.xlu0 %1302
        %1304 = vrot.lane.b32.xlu0 %v191, 92
        %v1305 = vpop.permute.xlu0 %1304
        %1306 = vrot.lane.b32.xlu0 %v192, 92
        %v1307 = vpop.permute.xlu0 %1306
        %1308 = vrot.lane.b32.xlu0 %v193, 92
        %v1309 = vpop.permute.xlu0 %1308
        %1310 = vrot.lane.b32.xlu0 %v194, 92
        %v1311 = vpop.permute.xlu0 %1310
        %1312 = vrot.lane.b32.xlu0 %v195, 92
        %v1313 = vpop.permute.xlu0 %1312
        %1314 = vrot.lane.b32.xlu0 %v196, 92
        %v1315 = vpop.permute.xlu0 %1314
        %1316 = vrot.lane.b32.xlu0 %v197, 92
        %v1317 = vpop.permute.xlu0 %1316
        %vm1318 = vcmask 752640
        %v1319 = vsel %vm1318, %v1301, %v1303
        %v1320 = vsel %vm1318, %v1303, %v1305
        %v1321 = vsel %vm1318, %v1305, %v1307
        %v1322 = vsel %vm1318, %v1307, %v1309
        %v1323 = vsel %vm1318, %v1309, %v1311
        %v1324 = vsel %vm1318, %v1311, %v1313
        %v1325 = vsel %vm1318, %v1313, %v1315
        %v1326 = vsel %vm1318, %v1315, %v1317
        %v1337 = vsel %vm245, %v1299, 0
        %1339 = vmatpush.msra.mxu0 0.0
        %1340 = vmatpush.msra.mxu0 0.0
        %1341 = vmatpush.msra.mxu0 0.0
        %1342 = vmatpush.msra.mxu0 0.0
        %1343 = vmatpush.msra.mxu0 0.0
        %1344 = vmatpush.msra.mxu0 0.0
        %1345 = vmatpush.msra.mxu0 0.0
        %1346 = vmatpush.msra.mxu0 0.0
        %1347 = vmatpush.msra.mxu0 0.0
        %1348 = vmatpush.msra.mxu0 0.0
        %1349 = vmatpush.msra.mxu0 0.0
        %1350 = vmatpush.msra.mxu0 0.0
        %1351 = vmatpush.msra.mxu0 0.0
        %1352 = vmatpush.msra.mxu0 0.0
        %1353 = vmatpush.msra.mxu0 0.0
        %1354 = vmatpush.msra.mxu0 %v1319
        %1355 = vmatmul.f32.gmra.mxu0 %v1337
        %v1356 = vpop.f32.mrf.mxu0
        %v1357 = vadd.f32 0.0, %v1356
        %1358 = vdwg.mxu0
        %1359 = vmatpush.msra.mxu0 0.0
        %1360 = vmatpush.msra.mxu0 0.0
        %1361 = vmatpush.msra.mxu0 0.0
        %1362 = vmatpush.msra.mxu0 0.0
        %1363 = vmatpush.msra.mxu0 0.0
        %1364 = vmatpush.msra.mxu0 0.0
        %1365 = vmatpush.msra.mxu0 0.0
        %1366 = vmatpush.msra.mxu0 0.0
        %1367 = vmatpush.msra.mxu0 0.0
        %1368 = vmatpush.msra.mxu0 0.0
        %1369 = vmatpush.msra.mxu0 0.0
        %1370 = vmatpush.msra.mxu0 0.0
        %1371 = vmatpush.msra.mxu0 0.0
        %1372 = vmatpush.msra.mxu0 0.0
        %1373 = vmatpush.msra.mxu0 0.0
        %1374 = vmatpush.msra.mxu0 %v1320
        %1375 = vmatmul.f32.gmra.mxu0 %v1337
        %v1376 = vpop.f32.mrf.mxu0
        %v1377 = vadd.f32 0.0, %v1376
        %1378 = vdwg.mxu0
        %1379 = vmatpush.msra.mxu0 0.0
        %1380 = vmatpush.msra.mxu0 0.0
        %1381 = vmatpush.msra.mxu0 0.0
        %1382 = vmatpush.msra.mxu0 0.0
        %1383 = vmatpush.msra.mxu0 0.0
        %1384 = vmatpush.msra.mxu0 0.0
        %1385 = vmatpush.msra.mxu0 0.0
        %1386 = vmatpush.msra.mxu0 0.0
        %1387 = vmatpush.msra.mxu0 0.0
        %1388 = vmatpush.msra.mxu0 0.0
        %1389 = vmatpush.msra.mxu0 0.0
        %1390 = vmatpush.msra.mxu0 0.0
        %1391 = vmatpush.msra.mxu0 0.0
        %1392 = vmatpush.msra.mxu0 0.0
        %1393 = vmatpush.msra.mxu0 0.0
        %1394 = vmatpush.msra.mxu0 %v1321
        %1395 = vmatmul.f32.gmra.mxu0 %v1337
        %v1396 = vpop.f32.mrf.mxu0
        %v1397 = vadd.f32 0.0, %v1396
        %1398 = vdwg.mxu0
        %1399 = vmatpush.msra.mxu0 0.0
        %1400 = vmatpush.msra.mxu0 0.0
        %1401 = vmatpush.msra.mxu0 0.0
        %1402 = vmatpush.msra.mxu0 0.0
        %1403 = vmatpush.msra.mxu0 0.0
        %1404 = vmatpush.msra.mxu0 0.0
        %1405 = vmatpush.msra.mxu0 0.0
        %1406 = vmatpush.msra.mxu0 0.0
        %1407 = vmatpush.msra.mxu0 0.0
        %1408 = vmatpush.msra.mxu0 0.0
        %1409 = vmatpush.msra.mxu0 0.0
        %1410 = vmatpush.msra.mxu0 0.0
        %1411 = vmatpush.msra.mxu0 0.0
        %1412 = vmatpush.msra.mxu0 0.0
        %1413 = vmatpush.msra.mxu0 0.0
        %1414 = vmatpush.msra.mxu0 %v1322
        %1415 = vmatmul.f32.gmra.mxu0 %v1337
        %v1416 = vpop.f32.mrf.mxu0
        %v1417 = vadd.f32 0.0, %v1416
        %1418 = vdwg.mxu0
        %1419 = vmatpush.msra.mxu0 0.0
        %1420 = vmatpush.msra.mxu0 0.0
        %1421 = vmatpush.msra.mxu0 0.0
        %1422 = vmatpush.msra.mxu0 0.0
        %1423 = vmatpush.msra.mxu0 0.0
        %1424 = vmatpush.msra.mxu0 0.0
        %1425 = vmatpush.msra.mxu0 0.0
        %1426 = vmatpush.msra.mxu0 0.0
        %1427 = vmatpush.msra.mxu0 0.0
        %1428 = vmatpush.msra.mxu0 0.0
        %1429 = vmatpush.msra.mxu0 0.0
        %1430 = vmatpush.msra.mxu0 0.0
        %1431 = vmatpush.msra.mxu0 0.0
        %1432 = vmatpush.msra.mxu0 0.0
        %1433 = vmatpush.msra.mxu0 0.0
        %1434 = vmatpush.msra.mxu0 %v1323
        %1435 = vmatmul.f32.gmra.mxu0 %v1337
        %v1436 = vpop.f32.mrf.mxu0
        %v1437 = vadd.f32 0.0, %v1436
        %1438 = vdwg.mxu0
        %1439 = vmatpush.msra.mxu0 0.0
        %1440 = vmatpush.msra.mxu0 0.0
        %1441 = vmatpush.msra.mxu0 0.0
        %1442 = vmatpush.msra.mxu0 0.0
        %1443 = vmatpush.msra.mxu0 0.0
        %1444 = vmatpush.msra.mxu0 0.0
        %1445 = vmatpush.msra.mxu0 0.0
        %1446 = vmatpush.msra.mxu0 0.0
        %1447 = vmatpush.msra.mxu0 0.0
        %1448 = vmatpush.msra.mxu0 0.0
        %1449 = vmatpush.msra.mxu0 0.0
        %1450 = vmatpush.msra.mxu0 0.0
        %1451 = vmatpush.msra.mxu0 0.0
        %1452 = vmatpush.msra.mxu0 0.0
        %1453 = vmatpush.msra.mxu0 0.0
        %1454 = vmatpush.msra.mxu0 %v1324
        %1455 = vmatmul.f32.gmra.mxu0 %v1337
        %v1456 = vpop.f32.mrf.mxu0
        %v1457 = vadd.f32 0.0, %v1456
        %1458 = vdwg.mxu0
        %1459 = vmatpush.msra.mxu0 0.0
        %1460 = vmatpush.msra.mxu0 0.0
        %1461 = vmatpush.msra.mxu0 0.0
        %1462 = vmatpush.msra.mxu0 0.0
        %1463 = vmatpush.msra.mxu0 0.0
        %1464 = vmatpush.msra.mxu0 0.0
        %1465 = vmatpush.msra.mxu0 0.0
        %1466 = vmatpush.msra.mxu0 0.0
        %1467 = vmatpush.msra.mxu0 0.0
        %1468 = vmatpush.msra.mxu0 0.0
        %1469 = vmatpush.msra.mxu0 0.0
        %1470 = vmatpush.msra.mxu0 0.0
        %1471 = vmatpush.msra.mxu0 0.0
        %1472 = vmatpush.msra.mxu0 0.0
        %1473 = vmatpush.msra.mxu0 0.0
        %1474 = vmatpush.msra.mxu0 %v1325
        %1475 = vmatmul.f32.gmra.mxu0 %v1337
        %v1476 = vpop.f32.mrf.mxu0
        %v1477 = vadd.f32 0.0, %v1476
        %1478 = vdwg.mxu0
        %1479 = vmatpush.msra.mxu0 0.0
        %1480 = vmatpush.msra.mxu0 0.0
        %1481 = vmatpush.msra.mxu0 0.0
        %1482 = vmatpush.msra.mxu0 0.0
        %1483 = vmatpush.msra.mxu0 0.0
        %1484 = vmatpush.msra.mxu0 0.0
        %1485 = vmatpush.msra.mxu0 0.0
        %1486 = vmatpush.msra.mxu0 0.0
        %1487 = vmatpush.msra.mxu0 0.0
        %1488 = vmatpush.msra.mxu0 0.0
        %1489 = vmatpush.msra.mxu0 0.0
        %1490 = vmatpush.msra.mxu0 0.0
        %1491 = vmatpush.msra.mxu0 0.0
        %1492 = vmatpush.msra.mxu0 0.0
        %1493 = vmatpush.msra.mxu0 0.0
        %1494 = vmatpush.msra.mxu0 %v1326
        %1495 = vmatmul.f32.gmra.mxu0 %v1337
        %v1496 = vpop.f32.mrf.mxu0
        %v1497 = vadd.f32 0.0, %v1496
        %1498 = vdwg.mxu0
        %1499 = vmatpush.msra.mxu0 0.0
        %1500 = vmatpush.msra.mxu0 0.0
        %1501 = vmatpush.msra.mxu0 0.0
        %1502 = vmatpush.msra.mxu0 0.0
        %1503 = vmatpush.msra.mxu0 0.0
        %1504 = vmatpush.msra.mxu0 0.0
        %1505 = vmatpush.msra.mxu0 0.0
        %1506 = vmatpush.msra.mxu0 0.0
        %1507 = vmatpush.msra.mxu0 0.0
        %1508 = vmatpush.msra.mxu0 0.0
        %1509 = vmatpush.msra.mxu0 0.0
        %1510 = vmatpush.msra.mxu0 0.0
        %1511 = vmatpush.msra.mxu0 0.0
        %1512 = vmatpush.msra.mxu0 0.0
        %1513 = vmatpush.msra.mxu0 0.0
        %1514 = vmatpush.msra.mxu0 %v1317
        %1515 = vmatmul.f32.gmra.mxu0 %v1337
        %v1516 = vpop.f32.mrf.mxu0
        %v1517 = vadd.f32 0.0, %v1516
        %1518 = vdwg.mxu0
        %v1519 = vadd.f32 %v1290, %v1357
        %v1520 = vadd.f32 %v1291, %v1377
        %v1521 = vadd.f32 %v1292, %v1397
        %v1522 = vadd.f32 %v1293, %v1417
        %v1523 = vadd.f32 %v1294, %v1437
        %v1524 = vadd.f32 %v1295, %v1457
        %v1525 = vadd.f32 %v1296, %v1477
        %v1526 = vadd.f32 %v1297, %v1497
        %v1527 = vadd.f32 %v1298, %v1517
        %v1528 = vld [vmem:[%s165] sm:$0xff]
        %v1529 = vld [vmem:[%s165 + $0x8] sm:$0xff]
        %v1530 = vld [vmem:[%s165 + $0x10] sm:$0xff]
        %v1531 = vld [vmem:[%s165 + $0x18] sm:$0xff]
        %v1532 = vld [vmem:[%s165 + $0x20] sm:$0xff]
        %v1533 = vld [vmem:[%s165 + $0x28] sm:$0xff]
        %v1534 = vld [vmem:[%s165 + $0x30] sm:$0xff]
        %v1535 = vld [vmem:[%s165 + $0x38] sm:$0xff]
        %v1536 = vld [vmem:[%s165 + $0x40] sm:$0xff]
        %v1537 = vld [vmem:[%s165 + $0x48] sm:$0xff]
        %v1538 = vld [vmem:[%s1 + $0x30] sm:$0xff]
        %1549 = vrot.lane.b32.xlu0 %v1528, 60
        %v1550 = vpop.permute.xlu0 %1549
        %1551 = vrot.lane.b32.xlu0 %v1529, 60
        %v1552 = vpop.permute.xlu0 %1551
        %1553 = vrot.lane.b32.xlu0 %v1530, 60
        %v1554 = vpop.permute.xlu0 %1553
        %1555 = vrot.lane.b32.xlu0 %v1531, 60
        %v1556 = vpop.permute.xlu0 %1555
        %1557 = vrot.lane.b32.xlu0 %v1532, 60
        %v1558 = vpop.permute.xlu0 %1557
        %1559 = vrot.lane.b32.xlu0 %v1533, 60
        %v1560 = vpop.permute.xlu0 %1559
        %1561 = vrot.lane.b32.xlu0 %v1534, 60
        %v1562 = vpop.permute.xlu0 %1561
        %1563 = vrot.lane.b32.xlu0 %v1535, 60
        %v1564 = vpop.permute.xlu0 %1563
        %1565 = vrot.lane.b32.xlu0 %v1536, 60
        %v1566 = vpop.permute.xlu0 %1565
        %1567 = vrot.lane.b32.xlu0 %v1537, 60
        %v1568 = vpop.permute.xlu0 %1567
        %vm1569 = vcmask 490496
        %v1570 = vsel %vm1569, %v1550, %v1552
        %v1571 = vsel %vm1569, %v1552, %v1554
        %v1572 = vsel %vm1569, %v1554, %v1556
        %v1573 = vsel %vm1569, %v1556, %v1558
        %v1574 = vsel %vm1569, %v1558, %v1560
        %v1575 = vsel %vm1569, %v1560, %v1562
        %v1576 = vsel %vm1569, %v1562, %v1564
        %v1577 = vsel %vm1569, %v1564, %v1566
        %v1578 = vsel %vm1569, %v1566, %v1568
        %v1589 = vsel %vm245, %v1538, 0
        %1591 = vmatpush.msra.mxu0 0.0
        %1592 = vmatpush.msra.mxu0 0.0
        %1593 = vmatpush.msra.mxu0 0.0
        %1594 = vmatpush.msra.mxu0 0.0
        %1595 = vmatpush.msra.mxu0 0.0
        %1596 = vmatpush.msra.mxu0 0.0
        %1597 = vmatpush.msra.mxu0 0.0
        %1598 = vmatpush.msra.mxu0 0.0
        %1599 = vmatpush.msra.mxu0 0.0
        %1600 = vmatpush.msra.mxu0 0.0
        %1601 = vmatpush.msra.mxu0 0.0
        %1602 = vmatpush.msra.mxu0 0.0
        %1603 = vmatpush.msra.mxu0 0.0
        %1604 = vmatpush.msra.mxu0 0.0
        %1605 = vmatpush.msra.mxu0 0.0
        %1606 = vmatpush.msra.mxu0 %v1570
        %1607 = vmatmul.f32.gmra.mxu0 %v1589
        %v1608 = vpop.f32.mrf.mxu0
        %v1609 = vadd.f32 0.0, %v1608
        %1610 = vdwg.mxu0
        %1611 = vmatpush.msra.mxu0 0.0
        %1612 = vmatpush.msra.mxu0 0.0
        %1613 = vmatpush.msra.mxu0 0.0
        %1614 = vmatpush.msra.mxu0 0.0
        %1615 = vmatpush.msra.mxu0 0.0
        %1616 = vmatpush.msra.mxu0 0.0
        %1617 = vmatpush.msra.mxu0 0.0
        %1618 = vmatpush.msra.mxu0 0.0
        %1619 = vmatpush.msra.mxu0 0.0
        %1620 = vmatpush.msra.mxu0 0.0
        %1621 = vmatpush.msra.mxu0 0.0
        %1622 = vmatpush.msra.mxu0 0.0
        %1623 = vmatpush.msra.mxu0 0.0
        %1624 = vmatpush.msra.mxu0 0.0
        %1625 = vmatpush.msra.mxu0 0.0
        %1626 = vmatpush.msra.mxu0 %v1571
        %1627 = vmatmul.f32.gmra.mxu0 %v1589
        %v1628 = vpop.f32.mrf.mxu0
        %v1629 = vadd.f32 0.0, %v1628
        %1630 = vdwg.mxu0
        %1631 = vmatpush.msra.mxu0 0.0
        %1632 = vmatpush.msra.mxu0 0.0
        %1633 = vmatpush.msra.mxu0 0.0
        %1634 = vmatpush.msra.mxu0 0.0
        %1635 = vmatpush.msra.mxu0 0.0
        %1636 = vmatpush.msra.mxu0 0.0
        %1637 = vmatpush.msra.mxu0 0.0
        %1638 = vmatpush.msra.mxu0 0.0
        %1639 = vmatpush.msra.mxu0 0.0
        %1640 = vmatpush.msra.mxu0 0.0
        %1641 = vmatpush.msra.mxu0 0.0
        %1642 = vmatpush.msra.mxu0 0.0
        %1643 = vmatpush.msra.mxu0 0.0
        %1644 = vmatpush.msra.mxu0 0.0
        %1645 = vmatpush.msra.mxu0 0.0
        %1646 = vmatpush.msra.mxu0 %v1572
        %1647 = vmatmul.f32.gmra.mxu0 %v1589
        %v1648 = vpop.f32.mrf.mxu0
        %v1649 = vadd.f32 0.0, %v1648
        %1650 = vdwg.mxu0
        %1651 = vmatpush.msra.mxu0 0.0
        %1652 = vmatpush.msra.mxu0 0.0
        %1653 = vmatpush.msra.mxu0 0.0
        %1654 = vmatpush.msra.mxu0 0.0
        %1655 = vmatpush.msra.mxu0 0.0
        %1656 = vmatpush.msra.mxu0 0.0
        %1657 = vmatpush.msra.mxu0 0.0
        %1658 = vmatpush.msra.mxu0 0.0
        %1659 = vmatpush.msra.mxu0 0.0
        %1660 = vmatpush.msra.mxu0 0.0
        %1661 = vmatpush.msra.mxu0 0.0
        %1662 = vmatpush.msra.mxu0 0.0
        %1663 = vmatpush.msra.mxu0 0.0
        %1664 = vmatpush.msra.mxu0 0.0
        %1665 = vmatpush.msra.mxu0 0.0
        %1666 = vmatpush.msra.mxu0 %v1573
        %1667 = vmatmul.f32.gmra.mxu0 %v1589
        %v1668 = vpop.f32.mrf.mxu0
        %v1669 = vadd.f32 0.0, %v1668
        %1670 = vdwg.mxu0
        %1671 = vmatpush.msra.mxu0 0.0
        %1672 = vmatpush.msra.mxu0 0.0
        %1673 = vmatpush.msra.mxu0 0.0
        %1674 = vmatpush.msra.mxu0 0.0
        %1675 = vmatpush.msra.mxu0 0.0
        %1676 = vmatpush.msra.mxu0 0.0
        %1677 = vmatpush.msra.mxu0 0.0
        %1678 = vmatpush.msra.mxu0 0.0
        %1679 = vmatpush.msra.mxu0 0.0
        %1680 = vmatpush.msra.mxu0 0.0
        %1681 = vmatpush.msra.mxu0 0.0
        %1682 = vmatpush.msra.mxu0 0.0
        %1683 = vmatpush.msra.mxu0 0.0
        %1684 = vmatpush.msra.mxu0 0.0
        %1685 = vmatpush.msra.mxu0 0.0
        %1686 = vmatpush.msra.mxu0 %v1574
        %1687 = vmatmul.f32.gmra.mxu0 %v1589
        %v1688 = vpop.f32.mrf.mxu0
        %v1689 = vadd.f32 0.0, %v1688
        %1690 = vdwg.mxu0
        %1691 = vmatpush.msra.mxu0 0.0
        %1692 = vmatpush.msra.mxu0 0.0
        %1693 = vmatpush.msra.mxu0 0.0
        %1694 = vmatpush.msra.mxu0 0.0
        %1695 = vmatpush.msra.mxu0 0.0
        %1696 = vmatpush.msra.mxu0 0.0
        %1697 = vmatpush.msra.mxu0 0.0
        %1698 = vmatpush.msra.mxu0 0.0
        %1699 = vmatpush.msra.mxu0 0.0
        %1700 = vmatpush.msra.mxu0 0.0
        %1701 = vmatpush.msra.mxu0 0.0
        %1702 = vmatpush.msra.mxu0 0.0
        %1703 = vmatpush.msra.mxu0 0.0
        %1704 = vmatpush.msra.mxu0 0.0
        %1705 = vmatpush.msra.mxu0 0.0
        %1706 = vmatpush.msra.mxu0 %v1575
        %1707 = vmatmul.f32.gmra.mxu0 %v1589
        %v1708 = vpop.f32.mrf.mxu0
        %v1709 = vadd.f32 0.0, %v1708
        %1710 = vdwg.mxu0
        %1711 = vmatpush.msra.mxu0 0.0
        %1712 = vmatpush.msra.mxu0 0.0
        %1713 = vmatpush.msra.mxu0 0.0
        %1714 = vmatpush.msra.mxu0 0.0
        %1715 = vmatpush.msra.mxu0 0.0
        %1716 = vmatpush.msra.mxu0 0.0
        %1717 = vmatpush.msra.mxu0 0.0
        %1718 = vmatpush.msra.mxu0 0.0
        %1719 = vmatpush.msra.mxu0 0.0
        %1720 = vmatpush.msra.mxu0 0.0
        %1721 = vmatpush.msra.mxu0 0.0
        %1722 = vmatpush.msra.mxu0 0.0
        %1723 = vmatpush.msra.mxu0 0.0
        %1724 = vmatpush.msra.mxu0 0.0
        %1725 = vmatpush.msra.mxu0 0.0
        %1726 = vmatpush.msra.mxu0 %v1576
        %1727 = vmatmul.f32.gmra.mxu0 %v1589
        %v1728 = vpop.f32.mrf.mxu0
        %v1729 = vadd.f32 0.0, %v1728
        %1730 = vdwg.mxu0
        %1731 = vmatpush.msra.mxu0 0.0
        %1732 = vmatpush.msra.mxu0 0.0
        %1733 = vmatpush.msra.mxu0 0.0
        %1734 = vmatpush.msra.mxu0 0.0
        %1735 = vmatpush.msra.mxu0 0.0
        %1736 = vmatpush.msra.mxu0 0.0
        %1737 = vmatpush.msra.mxu0 0.0
        %1738 = vmatpush.msra.mxu0 0.0
        %1739 = vmatpush.msra.mxu0 0.0
        %1740 = vmatpush.msra.mxu0 0.0
        %1741 = vmatpush.msra.mxu0 0.0
        %1742 = vmatpush.msra.mxu0 0.0
        %1743 = vmatpush.msra.mxu0 0.0
        %1744 = vmatpush.msra.mxu0 0.0
        %1745 = vmatpush.msra.mxu0 0.0
        %1746 = vmatpush.msra.mxu0 %v1577
        %1747 = vmatmul.f32.gmra.mxu0 %v1589
        %v1748 = vpop.f32.mrf.mxu0
        %v1749 = vadd.f32 0.0, %v1748
        %1750 = vdwg.mxu0
        %1751 = vmatpush.msra.mxu0 0.0
        %1752 = vmatpush.msra.mxu0 0.0
        %1753 = vmatpush.msra.mxu0 0.0
        %1754 = vmatpush.msra.mxu0 0.0
        %1755 = vmatpush.msra.mxu0 0.0
        %1756 = vmatpush.msra.mxu0 0.0
        %1757 = vmatpush.msra.mxu0 0.0
        %1758 = vmatpush.msra.mxu0 0.0
        %1759 = vmatpush.msra.mxu0 0.0
        %1760 = vmatpush.msra.mxu0 0.0
        %1761 = vmatpush.msra.mxu0 0.0
        %1762 = vmatpush.msra.mxu0 0.0
        %1763 = vmatpush.msra.mxu0 0.0
        %1764 = vmatpush.msra.mxu0 0.0
        %1765 = vmatpush.msra.mxu0 0.0
        %1766 = vmatpush.msra.mxu0 %v1578
        %1767 = vmatmul.f32.gmra.mxu0 %v1589
        %v1768 = vpop.f32.mrf.mxu0
        %v1769 = vadd.f32 0.0, %v1768
        %1770 = vdwg.mxu0
        %v1771 = vadd.f32 %v1519, %v1609
        %v1772 = vadd.f32 %v1520, %v1629
        %v1773 = vadd.f32 %v1521, %v1649
        %v1774 = vadd.f32 %v1522, %v1669
        %v1775 = vadd.f32 %v1523, %v1689
        %v1776 = vadd.f32 %v1524, %v1709
        %v1777 = vadd.f32 %v1525, %v1729
        %v1778 = vadd.f32 %v1526, %v1749
        %v1779 = vadd.f32 %v1527, %v1769
        %v1780 = vld [vmem:[%s1 + $0x38] sm:$0xff]
        %1781 = vrot.lane.b32.xlu0 %v1528, 59
        %v1782 = vpop.permute.xlu0 %1781
        %1783 = vrot.lane.b32.xlu0 %v1529, 59
        %v1784 = vpop.permute.xlu0 %1783
        %1785 = vrot.lane.b32.xlu0 %v1530, 59
        %v1786 = vpop.permute.xlu0 %1785
        %1787 = vrot.lane.b32.xlu0 %v1531, 59
        %v1788 = vpop.permute.xlu0 %1787
        %1789 = vrot.lane.b32.xlu0 %v1532, 59
        %v1790 = vpop.permute.xlu0 %1789
        %1791 = vrot.lane.b32.xlu0 %v1533, 59
        %v1792 = vpop.permute.xlu0 %1791
        %1793 = vrot.lane.b32.xlu0 %v1534, 59
        %v1794 = vpop.permute.xlu0 %1793
        %1795 = vrot.lane.b32.xlu0 %v1535, 59
        %v1796 = vpop.permute.xlu0 %1795
        %1797 = vrot.lane.b32.xlu0 %v1536, 59
        %v1798 = vpop.permute.xlu0 %1797
        %1799 = vrot.lane.b32.xlu0 %v1537, 59
        %v1800 = vpop.permute.xlu0 %1799
        %vm1801 = vcmask 482304
        %v1802 = vsel %vm1801, %v1782, %v1784
        %v1803 = vsel %vm1801, %v1784, %v1786
        %v1804 = vsel %vm1801, %v1786, %v1788
        %v1805 = vsel %vm1801, %v1788, %v1790
        %v1806 = vsel %vm1801, %v1790, %v1792
        %v1807 = vsel %vm1801, %v1792, %v1794
        %v1808 = vsel %vm1801, %v1794, %v1796
        %v1809 = vsel %vm1801, %v1796, %v1798
        %v1810 = vsel %vm1801, %v1798, %v1800
        %v1821 = vsel %vm245, %v1780, 0
        %1823 = vmatpush.msra.mxu0 0.0
        %1824 = vmatpush.msra.mxu0 0.0
        %1825 = vmatpush.msra.mxu0 0.0
        %1826 = vmatpush.msra.mxu0 0.0
        %1827 = vmatpush.msra.mxu0 0.0
        %1828 = vmatpush.msra.mxu0 0.0
        %1829 = vmatpush.msra.mxu0 0.0
        %1830 = vmatpush.msra.mxu0 0.0
        %1831 = vmatpush.msra.mxu0 0.0
        %1832 = vmatpush.msra.mxu0 0.0
        %1833 = vmatpush.msra.mxu0 0.0
        %1834 = vmatpush.msra.mxu0 0.0
        %1835 = vmatpush.msra.mxu0 0.0
        %1836 = vmatpush.msra.mxu0 0.0
        %1837 = vmatpush.msra.mxu0 0.0
        %1838 = vmatpush.msra.mxu0 %v1802
        %1839 = vmatmul.f32.gmra.mxu0 %v1821
        %v1840 = vpop.f32.mrf.mxu0
        %v1841 = vadd.f32 0.0, %v1840
        %1842 = vdwg.mxu0
        %1843 = vmatpush.msra.mxu0 0.0
        %1844 = vmatpush.msra.mxu0 0.0
        %1845 = vmatpush.msra.mxu0 0.0
        %1846 = vmatpush.msra.mxu0 0.0
        %1847 = vmatpush.msra.mxu0 0.0
        %1848 = vmatpush.msra.mxu0 0.0
        %1849 = vmatpush.msra.mxu0 0.0
        %1850 = vmatpush.msra.mxu0 0.0
        %1851 = vmatpush.msra.mxu0 0.0
        %1852 = vmatpush.msra.mxu0 0.0
        %1853 = vmatpush.msra.mxu0 0.0
        %1854 = vmatpush.msra.mxu0 0.0
        %1855 = vmatpush.msra.mxu0 0.0
        %1856 = vmatpush.msra.mxu0 0.0
        %1857 = vmatpush.msra.mxu0 0.0
        %1858 = vmatpush.msra.mxu0 %v1803
        %1859 = vmatmul.f32.gmra.mxu0 %v1821
        %v1860 = vpop.f32.mrf.mxu0
        %v1861 = vadd.f32 0.0, %v1860
        %1862 = vdwg.mxu0
        %1863 = vmatpush.msra.mxu0 0.0
        %1864 = vmatpush.msra.mxu0 0.0
        %1865 = vmatpush.msra.mxu0 0.0
        %1866 = vmatpush.msra.mxu0 0.0
        %1867 = vmatpush.msra.mxu0 0.0
        %1868 = vmatpush.msra.mxu0 0.0
        %1869 = vmatpush.msra.mxu0 0.0
        %1870 = vmatpush.msra.mxu0 0.0
        %1871 = vmatpush.msra.mxu0 0.0
        %1872 = vmatpush.msra.mxu0 0.0
        %1873 = vmatpush.msra.mxu0 0.0
        %1874 = vmatpush.msra.mxu0 0.0
        %1875 = vmatpush.msra.mxu0 0.0
        %1876 = vmatpush.msra.mxu0 0.0
        %1877 = vmatpush.msra.mxu0 0.0
        %1878 = vmatpush.msra.mxu0 %v1804
        %1879 = vmatmul.f32.gmra.mxu0 %v1821
        %v1880 = vpop.f32.mrf.mxu0
        %v1881 = vadd.f32 0.0, %v1880
        %1882 = vdwg.mxu0
        %1883 = vmatpush.msra.mxu0 0.0
        %1884 = vmatpush.msra.mxu0 0.0
        %1885 = vmatpush.msra.mxu0 0.0
        %1886 = vmatpush.msra.mxu0 0.0
        %1887 = vmatpush.msra.mxu0 0.0
        %1888 = vmatpush.msra.mxu0 0.0
        %1889 = vmatpush.msra.mxu0 0.0
        %1890 = vmatpush.msra.mxu0 0.0
        %1891 = vmatpush.msra.mxu0 0.0
        %1892 = vmatpush.msra.mxu0 0.0
        %1893 = vmatpush.msra.mxu0 0.0
        %1894 = vmatpush.msra.mxu0 0.0
        %1895 = vmatpush.msra.mxu0 0.0
        %1896 = vmatpush.msra.mxu0 0.0
        %1897 = vmatpush.msra.mxu0 0.0
        %1898 = vmatpush.msra.mxu0 %v1805
        %1899 = vmatmul.f32.gmra.mxu0 %v1821
        %v1900 = vpop.f32.mrf.mxu0
        %v1901 = vadd.f32 0.0, %v1900
        %1902 = vdwg.mxu0
        %1903 = vmatpush.msra.mxu0 0.0
        %1904 = vmatpush.msra.mxu0 0.0
        %1905 = vmatpush.msra.mxu0 0.0
        %1906 = vmatpush.msra.mxu0 0.0
        %1907 = vmatpush.msra.mxu0 0.0
        %1908 = vmatpush.msra.mxu0 0.0
        %1909 = vmatpush.msra.mxu0 0.0
        %1910 = vmatpush.msra.mxu0 0.0
        %1911 = vmatpush.msra.mxu0 0.0
        %1912 = vmatpush.msra.mxu0 0.0
        %1913 = vmatpush.msra.mxu0 0.0
        %1914 = vmatpush.msra.mxu0 0.0
        %1915 = vmatpush.msra.mxu0 0.0
        %1916 = vmatpush.msra.mxu0 0.0
        %1917 = vmatpush.msra.mxu0 0.0
        %1918 = vmatpush.msra.mxu0 %v1806
        %1919 = vmatmul.f32.gmra.mxu0 %v1821
        %v1920 = vpop.f32.mrf.mxu0
        %v1921 = vadd.f32 0.0, %v1920
        %1922 = vdwg.mxu0
        %1923 = vmatpush.msra.mxu0 0.0
        %1924 = vmatpush.msra.mxu0 0.0
        %1925 = vmatpush.msra.mxu0 0.0
        %1926 = vmatpush.msra.mxu0 0.0
        %1927 = vmatpush.msra.mxu0 0.0
        %1928 = vmatpush.msra.mxu0 0.0
        %1929 = vmatpush.msra.mxu0 0.0
        %1930 = vmatpush.msra.mxu0 0.0
        %1931 = vmatpush.msra.mxu0 0.0
        %1932 = vmatpush.msra.mxu0 0.0
        %1933 = vmatpush.msra.mxu0 0.0
        %1934 = vmatpush.msra.mxu0 0.0
        %1935 = vmatpush.msra.mxu0 0.0
        %1936 = vmatpush.msra.mxu0 0.0
        %1937 = vmatpush.msra.mxu0 0.0
        %1938 = vmatpush.msra.mxu0 %v1807
        %1939 = vmatmul.f32.gmra.mxu0 %v1821
        %v1940 = vpop.f32.mrf.mxu0
        %v1941 = vadd.f32 0.0, %v1940
        %1942 = vdwg.mxu0
        %1943 = vmatpush.msra.mxu0 0.0
        %1944 = vmatpush.msra.mxu0 0.0
        %1945 = vmatpush.msra.mxu0 0.0
        %1946 = vmatpush.msra.mxu0 0.0
        %1947 = vmatpush.msra.mxu0 0.0
        %1948 = vmatpush.msra.mxu0 0.0
        %1949 = vmatpush.msra.mxu0 0.0
        %1950 = vmatpush.msra.mxu0 0.0
        %1951 = vmatpush.msra.mxu0 0.0
        %1952 = vmatpush.msra.mxu0 0.0
        %1953 = vmatpush.msra.mxu0 0.0
        %1954 = vmatpush.msra.mxu0 0.0
        %1955 = vmatpush.msra.mxu0 0.0
        %1956 = vmatpush.msra.mxu0 0.0
        %1957 = vmatpush.msra.mxu0 0.0
        %1958 = vmatpush.msra.mxu0 %v1808
        %1959 = vmatmul.f32.gmra.mxu0 %v1821
        %v1960 = vpop.f32.mrf.mxu0
        %v1961 = vadd.f32 0.0, %v1960
        %1962 = vdwg.mxu0
        %1963 = vmatpush.msra.mxu0 0.0
        %1964 = vmatpush.msra.mxu0 0.0
        %1965 = vmatpush.msra.mxu0 0.0
        %1966 = vmatpush.msra.mxu0 0.0
        %1967 = vmatpush.msra.mxu0 0.0
        %1968 = vmatpush.msra.mxu0 0.0
        %1969 = vmatpush.msra.mxu0 0.0
        %1970 = vmatpush.msra.mxu0 0.0
        %1971 = vmatpush.msra.mxu0 0.0
        %1972 = vmatpush.msra.mxu0 0.0
        %1973 = vmatpush.msra.mxu0 0.0
        %1974 = vmatpush.msra.mxu0 0.0
        %1975 = vmatpush.msra.mxu0 0.0
        %1976 = vmatpush.msra.mxu0 0.0
        %1977 = vmatpush.msra.mxu0 0.0
        %1978 = vmatpush.msra.mxu0 %v1809
        %1979 = vmatmul.f32.gmra.mxu0 %v1821
        %v1980 = vpop.f32.mrf.mxu0
        %v1981 = vadd.f32 0.0, %v1980
        %1982 = vdwg.mxu0
        %1983 = vmatpush.msra.mxu0 0.0
        %1984 = vmatpush.msra.mxu0 0.0
        %1985 = vmatpush.msra.mxu0 0.0
        %1986 = vmatpush.msra.mxu0 0.0
        %1987 = vmatpush.msra.mxu0 0.0
        %1988 = vmatpush.msra.mxu0 0.0
        %1989 = vmatpush.msra.mxu0 0.0
        %1990 = vmatpush.msra.mxu0 0.0
        %1991 = vmatpush.msra.mxu0 0.0
        %1992 = vmatpush.msra.mxu0 0.0
        %1993 = vmatpush.msra.mxu0 0.0
        %1994 = vmatpush.msra.mxu0 0.0
        %1995 = vmatpush.msra.mxu0 0.0
        %1996 = vmatpush.msra.mxu0 0.0
        %1997 = vmatpush.msra.mxu0 0.0
        %1998 = vmatpush.msra.mxu0 %v1810
        %1999 = vmatmul.f32.gmra.mxu0 %v1821
        %v2000 = vpop.f32.mrf.mxu0
        %v2001 = vadd.f32 0.0, %v2000
        %2002 = vdwg.mxu0
        %v2003 = vadd.f32 %v1771, %v1841
        %v2004 = vadd.f32 %v1772, %v1861
        %v2005 = vadd.f32 %v1773, %v1881
        %v2006 = vadd.f32 %v1774, %v1901
        %v2007 = vadd.f32 %v1775, %v1921
        %v2008 = vadd.f32 %v1776, %v1941
        %v2009 = vadd.f32 %v1777, %v1961
        %v2010 = vadd.f32 %v1778, %v1981
        %v2011 = vadd.f32 %v1779, %v2001
        %v2012 = vld [vmem:[%s1 + $0x40] sm:$0xff]
        %2013 = vrot.lane.b32.xlu0 %v1528, 58
        %v2014 = vpop.permute.xlu0 %2013
        %2015 = vrot.lane.b32.xlu0 %v1529, 58
        %v2016 = vpop.permute.xlu0 %2015
        %2017 = vrot.lane.b32.xlu0 %v1530, 58
        %v2018 = vpop.permute.xlu0 %2017
        %2019 = vrot.lane.b32.xlu0 %v1531, 58
        %v2020 = vpop.permute.xlu0 %2019
        %2021 = vrot.lane.b32.xlu0 %v1532, 58
        %v2022 = vpop.permute.xlu0 %2021
        %2023 = vrot.lane.b32.xlu0 %v1533, 58
        %v2024 = vpop.permute.xlu0 %2023
        %2025 = vrot.lane.b32.xlu0 %v1534, 58
        %v2026 = vpop.permute.xlu0 %2025
        %2027 = vrot.lane.b32.xlu0 %v1535, 58
        %v2028 = vpop.permute.xlu0 %2027
        %2029 = vrot.lane.b32.xlu0 %v1536, 58
        %v2030 = vpop.permute.xlu0 %2029
        %2031 = vrot.lane.b32.xlu0 %v1537, 58
        %v2032 = vpop.permute.xlu0 %2031
        %vm2033 = vcmask 474112
        %v2034 = vsel %vm2033, %v2014, %v2016
        %v2035 = vsel %vm2033, %v2016, %v2018
        %v2036 = vsel %vm2033, %v2018, %v2020
        %v2037 = vsel %vm2033, %v2020, %v2022
        %v2038 = vsel %vm2033, %v2022, %v2024
        %v2039 = vsel %vm2033, %v2024, %v2026
        %v2040 = vsel %vm2033, %v2026, %v2028
        %v2041 = vsel %vm2033, %v2028, %v2030
        %v2042 = vsel %vm2033, %v2030, %v2032
        %v2053 = vsel %vm245, %v2012, 0
        %2055 = vmatpush.msra.mxu0 0.0
        %2056 = vmatpush.msra.mxu0 0.0
        %2057 = vmatpush.msra.mxu0 0.0
        %2058 = vmatpush.msra.mxu0 0.0
        %2059 = vmatpush.msra.mxu0 0.0
        %2060 = vmatpush.msra.mxu0 0.0
        %2061 = vmatpush.msra.mxu0 0.0
        %2062 = vmatpush.msra.mxu0 0.0
        %2063 = vmatpush.msra.mxu0 0.0
        %2064 = vmatpush.msra.mxu0 0.0
        %2065 = vmatpush.msra.mxu0 0.0
        %2066 = vmatpush.msra.mxu0 0.0
        %2067 = vmatpush.msra.mxu0 0.0
        %2068 = vmatpush.msra.mxu0 0.0
        %2069 = vmatpush.msra.mxu0 0.0
        %2070 = vmatpush.msra.mxu0 %v2034
        %2071 = vmatmul.f32.gmra.mxu0 %v2053
        %v2072 = vpop.f32.mrf.mxu0
        %v2073 = vadd.f32 0.0, %v2072
        %2074 = vdwg.mxu0
        %2075 = vmatpush.msra.mxu0 0.0
        %2076 = vmatpush.msra.mxu0 0.0
        %2077 = vmatpush.msra.mxu0 0.0
        %2078 = vmatpush.msra.mxu0 0.0
        %2079 = vmatpush.msra.mxu0 0.0
        %2080 = vmatpush.msra.mxu0 0.0
        %2081 = vmatpush.msra.mxu0 0.0
        %2082 = vmatpush.msra.mxu0 0.0
        %2083 = vmatpush.msra.mxu0 0.0
        %2084 = vmatpush.msra.mxu0 0.0
        %2085 = vmatpush.msra.mxu0 0.0
        %2086 = vmatpush.msra.mxu0 0.0
        %2087 = vmatpush.msra.mxu0 0.0
        %2088 = vmatpush.msra.mxu0 0.0
        %2089 = vmatpush.msra.mxu0 0.0
        %2090 = vmatpush.msra.mxu0 %v2035
        %2091 = vmatmul.f32.gmra.mxu0 %v2053
        %v2092 = vpop.f32.mrf.mxu0
        %v2093 = vadd.f32 0.0, %v2092
        %2094 = vdwg.mxu0
        %2095 = vmatpush.msra.mxu0 0.0
        %2096 = vmatpush.msra.mxu0 0.0
        %2097 = vmatpush.msra.mxu0 0.0
        %2098 = vmatpush.msra.mxu0 0.0
        %2099 = vmatpush.msra.mxu0 0.0
        %2100 = vmatpush.msra.mxu0 0.0
        %2101 = vmatpush.msra.mxu0 0.0
        %2102 = vmatpush.msra.mxu0 0.0
        %2103 = vmatpush.msra.mxu0 0.0
        %2104 = vmatpush.msra.mxu0 0.0
        %2105 = vmatpush.msra.mxu0 0.0
        %2106 = vmatpush.msra.mxu0 0.0
        %2107 = vmatpush.msra.mxu0 0.0
        %2108 = vmatpush.msra.mxu0 0.0
        %2109 = vmatpush.msra.mxu0 0.0
        %2110 = vmatpush.msra.mxu0 %v2036
        %2111 = vmatmul.f32.gmra.mxu0 %v2053
        %v2112 = vpop.f32.mrf.mxu0
        %v2113 = vadd.f32 0.0, %v2112
        %2114 = vdwg.mxu0
        %2115 = vmatpush.msra.mxu0 0.0
        %2116 = vmatpush.msra.mxu0 0.0
        %2117 = vmatpush.msra.mxu0 0.0
        %2118 = vmatpush.msra.mxu0 0.0
        %2119 = vmatpush.msra.mxu0 0.0
        %2120 = vmatpush.msra.mxu0 0.0
        %2121 = vmatpush.msra.mxu0 0.0
        %2122 = vmatpush.msra.mxu0 0.0
        %2123 = vmatpush.msra.mxu0 0.0
        %2124 = vmatpush.msra.mxu0 0.0
        %2125 = vmatpush.msra.mxu0 0.0
        %2126 = vmatpush.msra.mxu0 0.0
        %2127 = vmatpush.msra.mxu0 0.0
        %2128 = vmatpush.msra.mxu0 0.0
        %2129 = vmatpush.msra.mxu0 0.0
        %2130 = vmatpush.msra.mxu0 %v2037
        %2131 = vmatmul.f32.gmra.mxu0 %v2053
        %v2132 = vpop.f32.mrf.mxu0
        %v2133 = vadd.f32 0.0, %v2132
        %2134 = vdwg.mxu0
        %2135 = vmatpush.msra.mxu0 0.0
        %2136 = vmatpush.msra.mxu0 0.0
        %2137 = vmatpush.msra.mxu0 0.0
        %2138 = vmatpush.msra.mxu0 0.0
        %2139 = vmatpush.msra.mxu0 0.0
        %2140 = vmatpush.msra.mxu0 0.0
        %2141 = vmatpush.msra.mxu0 0.0
        %2142 = vmatpush.msra.mxu0 0.0
        %2143 = vmatpush.msra.mxu0 0.0
        %2144 = vmatpush.msra.mxu0 0.0
        %2145 = vmatpush.msra.mxu0 0.0
        %2146 = vmatpush.msra.mxu0 0.0
        %2147 = vmatpush.msra.mxu0 0.0
        %2148 = vmatpush.msra.mxu0 0.0
        %2149 = vmatpush.msra.mxu0 0.0
        %2150 = vmatpush.msra.mxu0 %v2038
        %2151 = vmatmul.f32.gmra.mxu0 %v2053
        %v2152 = vpop.f32.mrf.mxu0
        %v2153 = vadd.f32 0.0, %v2152
        %2154 = vdwg.mxu0
        %2155 = vmatpush.msra.mxu0 0.0
        %2156 = vmatpush.msra.mxu0 0.0
        %2157 = vmatpush.msra.mxu0 0.0
        %2158 = vmatpush.msra.mxu0 0.0
        %2159 = vmatpush.msra.mxu0 0.0
        %2160 = vmatpush.msra.mxu0 0.0
        %2161 = vmatpush.msra.mxu0 0.0
        %2162 = vmatpush.msra.mxu0 0.0
        %2163 = vmatpush.msra.mxu0 0.0
        %2164 = vmatpush.msra.mxu0 0.0
        %2165 = vmatpush.msra.mxu0 0.0
        %2166 = vmatpush.msra.mxu0 0.0
        %2167 = vmatpush.msra.mxu0 0.0
        %2168 = vmatpush.msra.mxu0 0.0
        %2169 = vmatpush.msra.mxu0 0.0
        %2170 = vmatpush.msra.mxu0 %v2039
        %2171 = vmatmul.f32.gmra.mxu0 %v2053
        %v2172 = vpop.f32.mrf.mxu0
        %v2173 = vadd.f32 0.0, %v2172
        %2174 = vdwg.mxu0
        %2175 = vmatpush.msra.mxu0 0.0
        %2176 = vmatpush.msra.mxu0 0.0
        %2177 = vmatpush.msra.mxu0 0.0
        %2178 = vmatpush.msra.mxu0 0.0
        %2179 = vmatpush.msra.mxu0 0.0
        %2180 = vmatpush.msra.mxu0 0.0
        %2181 = vmatpush.msra.mxu0 0.0
        %2182 = vmatpush.msra.mxu0 0.0
        %2183 = vmatpush.msra.mxu0 0.0
        %2184 = vmatpush.msra.mxu0 0.0
        %2185 = vmatpush.msra.mxu0 0.0
        %2186 = vmatpush.msra.mxu0 0.0
        %2187 = vmatpush.msra.mxu0 0.0
        %2188 = vmatpush.msra.mxu0 0.0
        %2189 = vmatpush.msra.mxu0 0.0
        %2190 = vmatpush.msra.mxu0 %v2040
        %2191 = vmatmul.f32.gmra.mxu0 %v2053
        %v2192 = vpop.f32.mrf.mxu0
        %v2193 = vadd.f32 0.0, %v2192
        %2194 = vdwg.mxu0
        %2195 = vmatpush.msra.mxu0 0.0
        %2196 = vmatpush.msra.mxu0 0.0
        %2197 = vmatpush.msra.mxu0 0.0
        %2198 = vmatpush.msra.mxu0 0.0
        %2199 = vmatpush.msra.mxu0 0.0
        %2200 = vmatpush.msra.mxu0 0.0
        %2201 = vmatpush.msra.mxu0 0.0
        %2202 = vmatpush.msra.mxu0 0.0
        %2203 = vmatpush.msra.mxu0 0.0
        %2204 = vmatpush.msra.mxu0 0.0
        %2205 = vmatpush.msra.mxu0 0.0
        %2206 = vmatpush.msra.mxu0 0.0
        %2207 = vmatpush.msra.mxu0 0.0
        %2208 = vmatpush.msra.mxu0 0.0
        %2209 = vmatpush.msra.mxu0 0.0
        %2210 = vmatpush.msra.mxu0 %v2041
        %2211 = vmatmul.f32.gmra.mxu0 %v2053
        %v2212 = vpop.f32.mrf.mxu0
        %v2213 = vadd.f32 0.0, %v2212
        %2214 = vdwg.mxu0
        %2215 = vmatpush.msra.mxu0 0.0
        %2216 = vmatpush.msra.mxu0 0.0
        %2217 = vmatpush.msra.mxu0 0.0
        %2218 = vmatpush.msra.mxu0 0.0
        %2219 = vmatpush.msra.mxu0 0.0
        %2220 = vmatpush.msra.mxu0 0.0
        %2221 = vmatpush.msra.mxu0 0.0
        %2222 = vmatpush.msra.mxu0 0.0
        %2223 = vmatpush.msra.mxu0 0.0
        %2224 = vmatpush.msra.mxu0 0.0
        %2225 = vmatpush.msra.mxu0 0.0
        %2226 = vmatpush.msra.mxu0 0.0
        %2227 = vmatpush.msra.mxu0 0.0
        %2228 = vmatpush.msra.mxu0 0.0
        %2229 = vmatpush.msra.mxu0 0.0
        %2230 = vmatpush.msra.mxu0 %v2042
        %2231 = vmatmul.f32.gmra.mxu0 %v2053
        %v2232 = vpop.f32.mrf.mxu0
        %v2233 = vadd.f32 0.0, %v2232
        %2234 = vdwg.mxu0
        %v2235 = vadd.f32 %v2003, %v2073
        %v2236 = vadd.f32 %v2004, %v2093
        %v2237 = vadd.f32 %v2005, %v2113
        %v2238 = vadd.f32 %v2006, %v2133
        %v2239 = vadd.f32 %v2007, %v2153
        %v2240 = vadd.f32 %v2008, %v2173
        %v2241 = vadd.f32 %v2009, %v2193
        %v2242 = vadd.f32 %v2010, %v2213
        %v2243 = vadd.f32 %v2011, %v2233
        %v2244 = vld [vmem:[%s2] sm:$0xff]
        %2246 = vset.pattern.permute.xlu0 0
        %2247 = vperm.xlu0 %2246, %v2244
        %v2248 = vpop.permute.xlu0 %2247
        %v2250 = vadd.f32 %v2235, %v2248
        %v2251 = vadd.f32 %v2236, %v2248
        %v2252 = vadd.f32 %v2237, %v2248
        %v2253 = vadd.f32 %v2238, %v2248
        %v2254 = vadd.f32 %v2239, %v2248
        %v2255 = vadd.f32 %v2240, %v2248
        %v2256 = vadd.f32 %v2241, %v2248
        %v2257 = vadd.f32 %v2242, %v2248
        %v2258 = vadd.f32 %v2243, %v2248
        %v2259 = vmax.f32 %v2250, 0.0
        %v2260 = vmax.f32 %v2251, 0.0
        %v2261 = vmax.f32 %v2252, 0.0
        %v2262 = vmax.f32 %v2253, 0.0
        %v2263 = vmax.f32 %v2254, 0.0
        %v2264 = vmax.f32 %v2255, 0.0
        %v2265 = vmax.f32 %v2256, 0.0
        %v2266 = vmax.f32 %v2257, 0.0
        %v2267 = vmax.f32 %v2258, 0.0
        %2268 = vst [vmem:[%s188] sm:$0xff] %v2259
        %2269 = vst [vmem:[%s188 + $0x8] sm:$0xff] %v2260
        %2270 = vst [vmem:[%s188 + $0x10] sm:$0xff] %v2261
        %2271 = vst [vmem:[%s188 + $0x18] sm:$0xff] %v2262
        %2272 = vst [vmem:[%s188 + $0x20] sm:$0xff] %v2263
        %2273 = vst [vmem:[%s188 + $0x28] sm:$0xff] %v2264
        %2274 = vst [vmem:[%s188 + $0x30] sm:$0xff] %v2265
        %2275 = vst [vmem:[%s188 + $0x38] sm:$0xff] %v2266
        %vm2276 = vcmask 523264
        %2277 = vst.msk [vmem:[%s188 + $0x40] sm:$0xff] %vm2276, %v2267
        %s2278 = sand.u32 %s96, 1
        %s2279 = scalar_lea.sflag [#allocation4], %s2278
        %s2280 = sand.u32 %s96, 1
        %s2281 = smul.addr %s2280, 72
        %s2282 = scalar_lea.vmem [#allocation5], %s2281
        // Predicated region
        $region37: #{tpu_custom_call.1} parent=31 // pred_check
          %p2283 = pneg %p106
        $region38: #{tpu_custom_call.1} parent=31 // pred_check_branch
          %2285 = sbr.rel (%p2283) target = $region40
        $region39: #{tpu_custom_call.1} parent=31 // pred_region
          %2287 = vsyncadd %s2279, 0
          %s2288 = smul.addr %s20, 9
          %s2289 = smul.addr %s2288, 8
          %s2290 = scalar_lea.hbm %s3, %s2289
          %s2292 = sshll.u32 %s2282, 4
          %s2293 = int_to_ptr.vmem [resolvable:$true] %s2292
          %s2294 = sshll.u32 %s2290, 4
          %s2295 = int_to_ptr.hbm [resolvable:$true] %s2294
          %2297 = dma.vmem_to_hbm [thread:$0]  %s2293, 1152, %s2295, %s2279
        $region40: #{tpu_custom_call.1} parent=31 // pred_fallthru
          _
      $region32: #{tpu_custom_call.1} parent=5 // pred_fallthru
        _
      %p2298 = scmp.le.s32.totalorder 2, %s15
      // Predicated region
      $region41: #{tpu_custom_call.1} parent=5 // pred_check
        %p2299 = pneg %p2298
      $region42: #{tpu_custom_call.1} parent=5 // pred_check_branch
        %2301 = sbr.rel (%p2299) target = $region44
      $region43: #{tpu_custom_call.1} parent=5 // pred_region
        %s2302 = ssub.s32 %s15, 2
        // Predicated region
        $region45: #{tpu_custom_call.1} parent=43 // pred_check
          %p2303 = pneg %p112
        $region46: #{tpu_custom_call.1} parent=43 // pred_check_branch
          %2305 = sbr.rel (%p2303) target = $region48
        $region47: #{tpu_custom_call.1} parent=43 // pred_region
          %s2306 = sand.u32 %s97, 1
          %s2307 = scalar_lea.sflag [#allocation4], %s2306
          %s2308 = sand.u32 %s97, 1
          %s2309 = smul.addr %s2308, 72
          %s2310 = scalar_lea.vmem [#allocation5], %s2309
          %2312 = dma.done %s2307, 1152
        $region48: #{tpu_custom_call.1} parent=43 // pred_fallthru
          _
      $region44: #{tpu_custom_call.1} parent=5 // pred_fallthru
        _
    $region6: #{tpu_custom_call.1} parent=1 // loop_footer
      %s19 = sadd.s32 1, %s15
    $region7: #{tpu_custom_call.1} parent=1 // loop_footer_branch
      %14 = sbr.rel target = $region3
    $region8: #{tpu_custom_call.1} parent=1 // loop_exit
      _
    %2313 = vsyncpa [#allocation3], 1
    %s2314 = scalar_lea.sflag [#allocation3], 1
    %2315 = vsyncpa %s2314, 1
    %2316 = vsyncpa [#allocation4], 1
    %s2317 = scalar_lea.sflag [#allocation4], 1
    %2318 = vsyncpa %s2317, 1

</llo_original>
